<compile_context>
chip_gen: v7x
topology: tpu7x:2x2x1
jax: 0.10.0
libtpu: 0.0.40
codegen_flags: <defaults>
</compile_context>

<pallas_src>
import functools

import jax
import jax.numpy as jnp
from jax import lax
from jax.experimental import pallas as pl
from jax.experimental.pallas import tpu as pltpu

EPS = 1e-5  # PyTorch GroupNorm default eps


def _group_avg_matrix(C, groups, hw):
    """Constant (C, C) matrix: M @ per_channel_sums -> per-channel group mean."""
    Cg = C // groups
    g_idx = jnp.arange(C, dtype=jnp.int32) // Cg
    same_group = (g_idx[:, None] == g_idx[None, :]).astype(jnp.float32)
    return same_group / float(Cg * hw)


def _border_masks(H, W):
    """(8, H*W) f32 validity masks for the 8 non-center 3x3 taps (zero pad)."""
    pos = jnp.arange(H * W, dtype=jnp.int32)
    r = pos // W
    c = pos % W
    masks = []
    for dh in (-1, 0, 1):
        for dw in (-1, 0, 1):
            if dh == 0 and dw == 0:
                continue
            valid = ((r + dh >= 0) & (r + dh < H) &
                     (c + dw >= 0) & (c + dw < W))
            masks.append(valid.astype(jnp.float32))
    return jnp.stack(masks, axis=0)


def _default_samples_per_step(N):
    """One big step on single-TC chips (v5e/v6e); 2 parallel steps on v7x."""
    try:
        kind = jax.devices()[0].device_kind.lower()
    except Exception:
        kind = ""
    dual_core = ("v7" in kind) or ("7x" in kind)
    if dual_core and N >= 2 and N % 2 == 0:
        return N // 2
    return N


def bottleneck_kernel(x_ref, w1_ref, w2_ref, w3_ref,
                      pmid_ref, pout_ref, mavg_mid_ref, mavg_out_ref,
                      mask_ref, out_ref, *, W, HW, samples):
    # ---- hoisted constant loads (shared across samples in this block) ------
    w1 = w1_ref[...]                       # (C_mid, C_in)
    w2 = w2_ref[...]                       # (C_mid, 9*C_mid)
    w3 = w3_ref[...]                       # (C_out, C_mid)
    pmid = pmid_ref[...]                   # (C_mid, 6): b1,g1,be1,b2,g2,be2
    pout = pout_ref[...]                   # (C_out, 3): b3,g3,be3
    b1, g1, be1 = pmid[:, 0:1], pmid[:, 1:2], pmid[:, 2:3]
    b2, g2, be2 = pmid[:, 3:4], pmid[:, 4:5], pmid[:, 5:6]
    b3, g3, be3 = pout[:, 0:1], pout[:, 1:2], pout[:, 2:3]
    mavg_mid = mavg_mid_ref[...]           # (C_mid, C_mid) group-average matrix
    mavg_out = mavg_out_ref[...]           # (C_out, C_out)
    masks = mask_ref[...]                  # (8, HW) border validity masks
    mask_rows = [masks[t:t + 1, :] for t in range(8)]   # hoisted slices

    def gn_relu(y, mavg, gamma, beta):
        """Batched GroupNorm + ReLU on a (C, HW) f32 tile.

        Per-channel sums via one lane reduce; group aggregation + broadcast
        back to channels via one tiny MXU matmul; two-pass variance; one
        fused normalize/affine/ReLU sweep.
        """
        s1 = jnp.sum(y, axis=1, keepdims=True)                        # (C, 1)
        mean = jnp.dot(mavg, s1, preferred_element_type=jnp.float32)  # (C, 1)
        d = y - mean
        s2 = jnp.sum(d * d, axis=1, keepdims=True)                    # (C, 1)
        var = jnp.dot(mavg, s2, preferred_element_type=jnp.float32)   # (C, 1)
        scale = lax.rsqrt(var + EPS) * gamma                          # (C, 1)
        return jnp.maximum(d * scale + beta, 0.0)

    # ---- static per-sample loop (samples is small: 1 or 2 here) ------------
    for s in range(samples):
        x = x_ref[s].astype(jnp.float32)                  # (C_in, HW), kept live

        # conv1: 1x1, C_in -> C_mid, then GroupNorm + ReLU
        y = jnp.dot(w1, x, preferred_element_type=jnp.float32) + b1
        y = gn_relu(y, mavg_mid, g1, be1)

        # conv2: 3x3, pad=1, as a single im2col matmul (taps via XLU rolls,
        # border taps zeroed with precomputed multiplicative masks).
        taps = []
        t = 0
        for dh in (-1, 0, 1):
            for dw in (-1, 0, 1):
                d = dh * W + dw
                if d == 0:
                    taps.append(y)
                else:
                    shifted = pltpu.roll(y, shift=(-d) % HW, axis=1)
                    taps.append(shifted * mask_rows[t])
                    t += 1
        x2 = jnp.concatenate(taps, axis=0)                # (9*C_mid, HW)
        y = jnp.dot(w2, x2, preferred_element_type=jnp.float32) + b2
        y = gn_relu(y, mavg_mid, g2, be2)

        # conv3: 1x1, C_mid -> C_out, then GroupNorm + ReLU
        y = jnp.dot(w3, y, preferred_element_type=jnp.float32) + b3
        y = gn_relu(y, mavg_out, g3, be3)

        # residual add + final ReLU (stride=1 => identity shortcut)
        out_ref[s] = jnp.maximum(x + y, 0.0).astype(out_ref.dtype)


def bottleneck_block(x_nchw, params, *, planes, groups, samples_per_step=None):
    """Forward pass. x_nchw: (N, C_in, H, W) float32. Returns NCHW output."""
    N, C_in, H, W = x_nchw.shape
    C_mid = planes // 4
    C_out = planes
    assert C_in == C_out, "stride=1 BottleneckBlock requires in_planes == planes"
    HW = H * W

    if samples_per_step is None:
        samples_per_step = _default_samples_per_step(N)
    Nb = samples_per_step
    assert N % Nb == 0
    G = N // Nb

    # NCHW view -> (N, C, HW): pure reshape, no HBM transpose / round-trip.
    x_k = x_nchw.reshape(N, C_in, HW)

    (w1, b1, g1, be1, w2, b2, g2, be2, w3, b3, g3, be3) = params

    # Kernel-friendly layouts, prepared once in the wrapper.
    w1_k = jnp.transpose(w1)                                  # (C_mid, C_in)
    # w2 is HWIO (3,3,C_mid,C_mid) -> (out, (kh*3+kw)*C_mid + c_in)
    w2_k = jnp.transpose(w2, (3, 0, 1, 2)).reshape(C_mid, 9 * C_mid)
    w3_k = jnp.transpose(w3)                                  # (C_out, C_mid)
    pmid = jnp.stack([b1, g1, be1, b2, g2, be2], axis=1)      # (C_mid, 6)
    pout = jnp.stack([b3, g3, be3], axis=1)                   # (C_out, 3)
    mavg_mid = _group_avg_matrix(C_mid, groups, HW)           # (C_mid, C_mid)
    mavg_out = _group_avg_matrix(C_out, groups, HW)           # (C_out, C_out)
    mask8 = _border_masks(H, W)                               # (8, HW)

    kernel = functools.partial(bottleneck_kernel, W=W, HW=HW, samples=Nb)

    def const_spec(shape):
        return pl.BlockSpec(shape, lambda i: (0, 0))

    out_k = pl.pallas_call(
        kernel,
        out_shape=jax.ShapeDtypeStruct((N, C_out, HW), x_nchw.dtype),
        grid_spec=pltpu.PrefetchScalarGridSpec(
            num_scalar_prefetch=0,
            grid=(G,),
            in_specs=[
                pl.BlockSpec((Nb, C_in, HW), lambda i: (i, 0, 0)),
                const_spec((C_mid, C_in)),
                const_spec((C_mid, 9 * C_mid)),
                const_spec((C_out, C_mid)),
                const_spec((C_mid, 6)),
                const_spec((C_out, 3)),
                const_spec((C_mid, C_mid)),
                const_spec((C_out, C_out)),
                const_spec((8, HW)),
            ],
            out_specs=pl.BlockSpec((Nb, C_out, HW), lambda i: (i, 0, 0)),
        ),
        compiler_params=pltpu.CompilerParams(
            dimension_semantics=("parallel",),
            vmem_limit_bytes=32 * 1024 * 1024),
    )(x_k, w1_k, w2_k, w3_k, pmid, pout, mavg_mid, mavg_out, mask8)

    return out_k.reshape(N, C_out, H, W)


def make_params(key, in_planes, planes):
    """Deterministic synthetic parameters (reference-friendly layouts)."""
    C_mid = planes // 4
    ks = jax.random.split(key, 12)
    s = 0.1
    w1 = s * jax.random.normal(ks[0], (in_planes, C_mid), jnp.float32)
    b1 = s * jax.random.normal(ks[1], (C_mid,), jnp.float32)
    g1 = 1.0 + s * jax.random.normal(ks[2], (C_mid,), jnp.float32)
    be1 = s * jax.random.normal(ks[3], (C_mid,), jnp.float32)
    w2 = s * jax.random.normal(ks[4], (3, 3, C_mid, C_mid), jnp.float32)  # HWIO
    b2 = s * jax.random.normal(ks[5], (C_mid,), jnp.float32)
    g2 = 1.0 + s * jax.random.normal(ks[6], (C_mid,), jnp.float32)
    be2 = s * jax.random.normal(ks[7], (C_mid,), jnp.float32)
    w3 = s * jax.random.normal(ks[8], (C_mid, planes), jnp.float32)
    b3 = s * jax.random.normal(ks[9], (planes,), jnp.float32)
    g3 = 1.0 + s * jax.random.normal(ks[10], (planes,), jnp.float32)
    be3 = s * jax.random.normal(ks[11], (planes,), jnp.float32)
    return (w1, b1, g1, be1, w2, b2, g2, be2, w3, b3, g3, be3)


def reference_forward(x_nchw, params, *, planes, groups):
    """Plain-JAX reference (matches PyTorch semantics) for verification."""
    (w1, b1, g1, be1, w2, b2, g2, be2, w3, b3, g3, be3) = params
    C_mid = planes // 4
    C_in = x_nchw.shape[1]
    x = jnp.transpose(x_nchw, (0, 2, 3, 1))  # NHWC

    def gn(y, gamma, beta, G):
        N, H, W, C = y.shape
        Cg = C // G
        yr = y.reshape(N, H, W, G, Cg)
        mean = yr.mean(axis=(1, 2, 4), keepdims=True)
        var = yr.var(axis=(1, 2, 4), keepdims=True)
        yn = ((yr - mean) / jnp.sqrt(var + EPS)).reshape(N, H, W, C)
        return yn * gamma.reshape(1, 1, 1, C) + beta.reshape(1, 1, 1, C)

    def conv(y, w_hwio, b, pad):
        o = lax.conv_general_dilated(
            y, w_hwio, (1, 1), pad,
            dimension_numbers=('NHWC', 'HWIO', 'NHWC'))
        return o + b.reshape(1, 1, 1, -1)

    y = jax.nn.relu(gn(conv(x, w1.reshape(1, 1, C_in, C_mid), b1, 'VALID'),
                       g1, be1, groups))
    y = jax.nn.relu(gn(conv(y, w2, b2, 'SAME'), g2, be2, groups))
    y = jax.nn.relu(gn(conv(y, w3.reshape(1, 1, C_mid, planes), b3, 'VALID'),
                       g3, be3, groups))
    out = jax.nn.relu(x + y)
    return jnp.transpose(out, (0, 3, 1, 2))


if __name__ == "__main__":
    # Small shapes consistent with the module: stride=1 => in_planes == planes.
    N, H, W = 2, 16, 16
    in_planes = planes = 32
    groups = planes // 8          # GroupNorm num_groups = 4

    key = jax.random.PRNGKey(0)
    kx, kp = jax.random.split(key)
    x = jax.random.normal(kx, (N, in_planes, H, W), jnp.float32)
    params = make_params(kp, in_planes, planes)

    ref = jax.block_until_ready(
        reference_forward(x, params, planes=planes, groups=groups))

    # Default (generation-aware) packing.
    out = jax.block_until_ready(
        bottleneck_block(x, params, planes=planes, groups=groups))
    assert out.shape == (N, planes, H, W)
    assert jnp.allclose(out, ref, atol=2e-3, rtol=2e-3), \
        f"default: max abs err {jnp.max(jnp.abs(out - ref))}"

    # Explicit coverage of both packings: all samples in one grid step
    # (samples_per_step=N) and one sample per grid step (grid of N steps).
    for nb in (N, 1):
        o = jax.block_until_ready(
            bottleneck_block(x, params, planes=planes, groups=groups,
                             samples_per_step=nb))
        assert jnp.allclose(o, ref, atol=2e-3, rtol=2e-3), \
            f"samples_per_step={nb}: max abs err {jnp.max(jnp.abs(o - ref))}"

    print("KERNEL_OK")
</pallas_src>

<mosaic_0001>
module attributes {stable_mosaic.version = 11 : i64} {
  func.func @bottleneck_kernel(%arg0: i32, %arg1: memref<2x32x256xf32, #tpu.memory_space<vmem>>, %arg2: memref<8x32xf32, #tpu.memory_space<vmem>>, %arg3: memref<8x72xf32, #tpu.memory_space<vmem>>, %arg4: memref<32x8xf32, #tpu.memory_space<vmem>>, %arg5: memref<8x6xf32, #tpu.memory_space<vmem>>, %arg6: memref<32x3xf32, #tpu.memory_space<vmem>>, %arg7: memref<8x8xf32, #tpu.memory_space<vmem>>, %arg8: memref<32x32xf32, #tpu.memory_space<vmem>>, %arg9: memref<8x256xf32, #tpu.memory_space<vmem>>, %arg10: memref<2x32x256xf32, #tpu.memory_space<vmem>>) attributes {dimension_semantics = [#tpu.dimension_semantics<parallel>], iteration_bounds = array<i64: 1>, scalar_prefetch = 0 : i64, scratch_operands = 0 : i64, tpu.core_type = #tpu.core_type<tc>, window_params = [{transform_indices = @transform_0, window_bounds = array<i64: 2, 32, 256>}, {pipeline_mode = #tpu.pipeline_mode<synchronous>, transform_indices = @transform_1, window_bounds = array<i64: 8, 32>}, {pipeline_mode = #tpu.pipeline_mode<synchronous>, transform_indices = @transform_2, window_bounds = array<i64: 8, 72>}, {pipeline_mode = #tpu.pipeline_mode<synchronous>, transform_indices = @transform_3, window_bounds = array<i64: 32, 8>}, {pipeline_mode = #tpu.pipeline_mode<synchronous>, transform_indices = @transform_4, window_bounds = array<i64: 8, 6>}, {pipeline_mode = #tpu.pipeline_mode<synchronous>, transform_indices = @transform_5, window_bounds = array<i64: 32, 3>}, {pipeline_mode = #tpu.pipeline_mode<synchronous>, transform_indices = @transform_6, window_bounds = array<i64: 8, 8>}, {pipeline_mode = #tpu.pipeline_mode<synchronous>, transform_indices = @transform_7, window_bounds = array<i64: 32, 32>}, {pipeline_mode = #tpu.pipeline_mode<synchronous>, transform_indices = @transform_8, window_bounds = array<i64: 8, 256>}, {transform_indices = @transform_9, window_bounds = array<i64: 2, 32, 256>}]} {
    %c0 = arith.constant 0 : index
    %c0_0 = arith.constant 0 : index
    %0 = vector.load %arg2[%c0, %c0_0] : memref<8x32xf32, #tpu.memory_space<vmem>>, vector<8x32xf32>
    %c0_1 = arith.constant 0 : index
    %c0_2 = arith.constant 0 : index
    %1 = vector.load %arg3[%c0_1, %c0_2] : memref<8x72xf32, #tpu.memory_space<vmem>>, vector<8x72xf32>
    %c0_3 = arith.constant 0 : index
    %c0_4 = arith.constant 0 : index
    %2 = vector.load %arg4[%c0_3, %c0_4] : memref<32x8xf32, #tpu.memory_space<vmem>>, vector<32x8xf32>
    %c0_5 = arith.constant 0 : index
    %c0_6 = arith.constant 0 : index
    %3 = vector.load %arg5[%c0_5, %c0_6] : memref<8x6xf32, #tpu.memory_space<vmem>>, vector<8x6xf32>
    %c0_7 = arith.constant 0 : index
    %c0_8 = arith.constant 0 : index
    %4 = vector.load %arg6[%c0_7, %c0_8] : memref<32x3xf32, #tpu.memory_space<vmem>>, vector<32x3xf32>
    %5 = vector.extract_strided_slice %3 {offsets = [0, 0], sizes = [8, 1], strides = [1, 1]} : vector<8x6xf32> to vector<8x1xf32>
    %6 = vector.extract_strided_slice %3 {offsets = [0, 1], sizes = [8, 1], strides = [1, 1]} : vector<8x6xf32> to vector<8x1xf32>
    %7 = vector.extract_strided_slice %3 {offsets = [0, 2], sizes = [8, 1], strides = [1, 1]} : vector<8x6xf32> to vector<8x1xf32>
    %8 = vector.extract_strided_slice %3 {offsets = [0, 3], sizes = [8, 1], strides = [1, 1]} : vector<8x6xf32> to vector<8x1xf32>
    %9 = vector.extract_strided_slice %3 {offsets = [0, 4], sizes = [8, 1], strides = [1, 1]} : vector<8x6xf32> to vector<8x1xf32>
    %10 = vector.extract_strided_slice %3 {offsets = [0, 5], sizes = [8, 1], strides = [1, 1]} : vector<8x6xf32> to vector<8x1xf32>
    %11 = vector.extract_strided_slice %4 {offsets = [0, 0], sizes = [32, 1], strides = [1, 1]} : vector<32x3xf32> to vector<32x1xf32>
    %12 = vector.extract_strided_slice %4 {offsets = [0, 1], sizes = [32, 1], strides = [1, 1]} : vector<32x3xf32> to vector<32x1xf32>
    %13 = vector.extract_strided_slice %4 {offsets = [0, 2], sizes = [32, 1], strides = [1, 1]} : vector<32x3xf32> to vector<32x1xf32>
    %c0_9 = arith.constant 0 : index
    %c0_10 = arith.constant 0 : index
    %14 = vector.load %arg7[%c0_9, %c0_10] : memref<8x8xf32, #tpu.memory_space<vmem>>, vector<8x8xf32>
    %c0_11 = arith.constant 0 : index
    %c0_12 = arith.constant 0 : index
    %15 = vector.load %arg8[%c0_11, %c0_12] : memref<32x32xf32, #tpu.memory_space<vmem>>, vector<32x32xf32>
    %c0_13 = arith.constant 0 : index
    %c0_14 = arith.constant 0 : index
    %16 = vector.load %arg9[%c0_13, %c0_14] : memref<8x256xf32, #tpu.memory_space<vmem>>, vector<8x256xf32>
    %17 = vector.extract_strided_slice %16 {offsets = [0, 0], sizes = [1, 256], strides = [1, 1]} : vector<8x256xf32> to vector<1x256xf32>
    %18 = vector.extract_strided_slice %16 {offsets = [1, 0], sizes = [1, 256], strides = [1, 1]} : vector<8x256xf32> to vector<1x256xf32>
    %19 = vector.extract_strided_slice %16 {offsets = [2, 0], sizes = [1, 256], strides = [1, 1]} : vector<8x256xf32> to vector<1x256xf32>
    %20 = vector.extract_strided_slice %16 {offsets = [3, 0], sizes = [1, 256], strides = [1, 1]} : vector<8x256xf32> to vector<1x256xf32>
    %21 = vector.extract_strided_slice %16 {offsets = [4, 0], sizes = [1, 256], strides = [1, 1]} : vector<8x256xf32> to vector<1x256xf32>
    %22 = vector.extract_strided_slice %16 {offsets = [5, 0], sizes = [1, 256], strides = [1, 1]} : vector<8x256xf32> to vector<1x256xf32>
    %23 = vector.extract_strided_slice %16 {offsets = [6, 0], sizes = [1, 256], strides = [1, 1]} : vector<8x256xf32> to vector<1x256xf32>
    %24 = vector.extract_strided_slice %16 {offsets = [7, 0], sizes = [1, 256], strides = [1, 1]} : vector<8x256xf32> to vector<1x256xf32>
    %c0_15 = arith.constant 0 : index
    %c0_16 = arith.constant 0 : index
    %c0_17 = arith.constant 0 : index
    %25 = vector.load %arg1[%c0_15, %c0_16, %c0_17] : memref<2x32x256xf32, #tpu.memory_space<vmem>>, vector<1x32x256xf32>
    %26 = vector.shape_cast %25 : vector<1x32x256xf32> to vector<32x256xf32>
    %cst = arith.constant dense<0.000000e+00> : vector<8x256xf32>
    %27 = tpu.matmul %0, %26, %cst {dimension_numbers = #tpu.dot_dimension_numbers<[1], [0], [0], [1], [0, 0, 1, 1], [], []>} : vector<8x32xf32>, vector<32x256xf32>, vector<8x256xf32> -> vector<8x256xf32>
    %28 = vector.broadcast %5 : vector<8x1xf32> to vector<8x256xf32>
    %29 = arith.addf %27, %28 : vector<8x256xf32>
    %cst_18 = arith.constant dense<0.000000e+00> : vector<8xf32>
    %30 = vector.multi_reduction <add>, %29, %cst_18 [1] : vector<8x256xf32> to vector<8xf32>
    %31 = vector.shape_cast %30 : vector<8xf32> to vector<8x1xf32>
    %cst_19 = arith.constant dense<0.000000e+00> : vector<8x1xf32>
    %32 = tpu.matmul %14, %31, %cst_19 {dimension_numbers = #tpu.dot_dimension_numbers<[1], [0], [0], [1], [0, 0, 1, 1], [], []>} : vector<8x8xf32>, vector<8x1xf32>, vector<8x1xf32> -> vector<8x1xf32>
    %33 = vector.broadcast %32 : vector<8x1xf32> to vector<8x256xf32>
    %34 = arith.subf %29, %33 : vector<8x256xf32>
    %35 = arith.mulf %34, %34 : vector<8x256xf32>
    %cst_20 = arith.constant dense<0.000000e+00> : vector<8xf32>
    %36 = vector.multi_reduction <add>, %35, %cst_20 [1] : vector<8x256xf32> to vector<8xf32>
    %37 = vector.shape_cast %36 : vector<8xf32> to vector<8x1xf32>
    %cst_21 = arith.constant dense<0.000000e+00> : vector<8x1xf32>
    %38 = tpu.matmul %14, %37, %cst_21 {dimension_numbers = #tpu.dot_dimension_numbers<[1], [0], [0], [1], [0, 0, 1, 1], [], []>} : vector<8x8xf32>, vector<8x1xf32>, vector<8x1xf32> -> vector<8x1xf32>
    %cst_22 = arith.constant 9.99999974E-6 : f32
    %39 = vector.broadcast %cst_22 : f32 to vector<8x1xf32>
    %40 = arith.addf %38, %39 : vector<8x1xf32>
    %41 = math.rsqrt %40 : vector<8x1xf32>
    %42 = arith.mulf %41, %6 : vector<8x1xf32>
    %43 = vector.broadcast %42 : vector<8x1xf32> to vector<8x256xf32>
    %44 = arith.mulf %34, %43 : vector<8x256xf32>
    %45 = vector.broadcast %7 : vector<8x1xf32> to vector<8x256xf32>
    %46 = arith.addf %44, %45 : vector<8x256xf32>
    %cst_23 = arith.constant 0.000000e+00 : f32
    %47 = vector.broadcast %cst_23 : f32 to vector<8x256xf32>
    %48 = arith.maximumf %46, %47 : vector<8x256xf32>
    %c17_i32 = arith.constant 17 : i32
    %49 = tpu.dynamic_rotate %48 by %c17_i32 dim 1 : vector<8x256xf32>, i32 -> vector<8x256xf32>
    %50 = vector.broadcast %17 : vector<1x256xf32> to vector<8x256xf32>
    %51 = arith.mulf %49, %50 : vector<8x256xf32>
    %c16_i32 = arith.constant 16 : i32
    %52 = tpu.dynamic_rotate %48 by %c16_i32 dim 1 : vector<8x256xf32>, i32 -> vector<8x256xf32>
    %53 = vector.broadcast %18 : vector<1x256xf32> to vector<8x256xf32>
    %54 = arith.mulf %52, %53 : vector<8x256xf32>
    %c15_i32 = arith.constant 15 : i32
    %55 = tpu.dynamic_rotate %48 by %c15_i32 dim 1 : vector<8x256xf32>, i32 -> vector<8x256xf32>
    %56 = vector.broadcast %19 : vector<1x256xf32> to vector<8x256xf32>
    %57 = arith.mulf %55, %56 : vector<8x256xf32>
    %c1_i32 = arith.constant 1 : i32
    %58 = tpu.dynamic_rotate %48 by %c1_i32 dim 1 : vector<8x256xf32>, i32 -> vector<8x256xf32>
    %59 = vector.broadcast %20 : vector<1x256xf32> to vector<8x256xf32>
    %60 = arith.mulf %58, %59 : vector<8x256xf32>
    %c255_i32 = arith.constant 255 : i32
    %61 = tpu.dynamic_rotate %48 by %c255_i32 dim 1 : vector<8x256xf32>, i32 -> vector<8x256xf32>
    %62 = vector.broadcast %21 : vector<1x256xf32> to vector<8x256xf32>
    %63 = arith.mulf %61, %62 : vector<8x256xf32>
    %c241_i32 = arith.constant 241 : i32
    %64 = tpu.dynamic_rotate %48 by %c241_i32 dim 1 : vector<8x256xf32>, i32 -> vector<8x256xf32>
    %65 = vector.broadcast %22 : vector<1x256xf32> to vector<8x256xf32>
    %66 = arith.mulf %64, %65 : vector<8x256xf32>
    %c240_i32 = arith.constant 240 : i32
    %67 = tpu.dynamic_rotate %48 by %c240_i32 dim 1 : vector<8x256xf32>, i32 -> vector<8x256xf32>
    %68 = vector.broadcast %23 : vector<1x256xf32> to vector<8x256xf32>
    %69 = arith.mulf %67, %68 : vector<8x256xf32>
    %c239_i32 = arith.constant 239 : i32
    %70 = tpu.dynamic_rotate %48 by %c239_i32 dim 1 : vector<8x256xf32>, i32 -> vector<8x256xf32>
    %71 = vector.broadcast %24 : vector<1x256xf32> to vector<8x256xf32>
    %72 = arith.mulf %70, %71 : vector<8x256xf32>
    %73 = tpu.concatenate %51, %54, %57, %60, %48, %63, %66, %69, %72 in 0 : vector<8x256xf32>, vector<8x256xf32>, vector<8x256xf32>, vector<8x256xf32>, vector<8x256xf32>, vector<8x256xf32>, vector<8x256xf32>, vector<8x256xf32>, vector<8x256xf32> -> vector<72x256xf32>
    %cst_24 = arith.constant dense<0.000000e+00> : vector<8x256xf32>
    %74 = tpu.matmul %1, %73, %cst_24 {dimension_numbers = #tpu.dot_dimension_numbers<[1], [0], [0], [1], [0, 0, 1, 1], [], []>} : vector<8x72xf32>, vector<72x256xf32>, vector<8x256xf32> -> vector<8x256xf32>
    %75 = vector.broadcast %8 : vector<8x1xf32> to vector<8x256xf32>
    %76 = arith.addf %74, %75 : vector<8x256xf32>
    %cst_25 = arith.constant dense<0.000000e+00> : vector<8xf32>
    %77 = vector.multi_reduction <add>, %76, %cst_25 [1] : vector<8x256xf32> to vector<8xf32>
    %78 = vector.shape_cast %77 : vector<8xf32> to vector<8x1xf32>
    %cst_26 = arith.constant dense<0.000000e+00> : vector<8x1xf32>
    %79 = tpu.matmul %14, %78, %cst_26 {dimension_numbers = #tpu.dot_dimension_numbers<[1], [0], [0], [1], [0, 0, 1, 1], [], []>} : vector<8x8xf32>, vector<8x1xf32>, vector<8x1xf32> -> vector<8x1xf32>
    %80 = vector.broadcast %79 : vector<8x1xf32> to vector<8x256xf32>
    %81 = arith.subf %76, %80 : vector<8x256xf32>
    %82 = arith.mulf %81, %81 : vector<8x256xf32>
    %cst_27 = arith.constant dense<0.000000e+00> : vector<8xf32>
    %83 = vector.multi_reduction <add>, %82, %cst_27 [1] : vector<8x256xf32> to vector<8xf32>
    %84 = vector.shape_cast %83 : vector<8xf32> to vector<8x1xf32>
    %cst_28 = arith.constant dense<0.000000e+00> : vector<8x1xf32>
    %85 = tpu.matmul %14, %84, %cst_28 {dimension_numbers = #tpu.dot_dimension_numbers<[1], [0], [0], [1], [0, 0, 1, 1], [], []>} : vector<8x8xf32>, vector<8x1xf32>, vector<8x1xf32> -> vector<8x1xf32>
    %cst_29 = arith.constant 9.99999974E-6 : f32
    %86 = vector.broadcast %cst_29 : f32 to vector<8x1xf32>
    %87 = arith.addf %85, %86 : vector<8x1xf32>
    %88 = math.rsqrt %87 : vector<8x1xf32>
    %89 = arith.mulf %88, %9 : vector<8x1xf32>
    %90 = vector.broadcast %89 : vector<8x1xf32> to vector<8x256xf32>
    %91 = arith.mulf %81, %90 : vector<8x256xf32>
    %92 = vector.broadcast %10 : vector<8x1xf32> to vector<8x256xf32>
    %93 = arith.addf %91, %92 : vector<8x256xf32>
    %cst_30 = arith.constant 0.000000e+00 : f32
    %94 = vector.broadcast %cst_30 : f32 to vector<8x256xf32>
    %95 = arith.maximumf %93, %94 : vector<8x256xf32>
    %cst_31 = arith.constant dense<0.000000e+00> : vector<32x256xf32>
    %96 = tpu.matmul %2, %95, %cst_31 {dimension_numbers = #tpu.dot_dimension_numbers<[1], [0], [0], [1], [0, 0, 1, 1], [], []>} : vector<32x8xf32>, vector<8x256xf32>, vector<32x256xf32> -> vector<32x256xf32>
    %97 = vector.broadcast %11 : vector<32x1xf32> to vector<32x256xf32>
    %98 = arith.addf %96, %97 : vector<32x256xf32>
    %cst_32 = arith.constant dense<0.000000e+00> : vector<32xf32>
    %99 = vector.multi_reduction <add>, %98, %cst_32 [1] : vector<32x256xf32> to vector<32xf32>
    %100 = vector.shape_cast %99 : vector<32xf32> to vector<32x1xf32>
    %cst_33 = arith.constant dense<0.000000e+00> : vector<32x1xf32>
    %101 = tpu.matmul %15, %100, %cst_33 {dimension_numbers = #tpu.dot_dimension_numbers<[1], [0], [0], [1], [0, 0, 1, 1], [], []>} : vector<32x32xf32>, vector<32x1xf32>, vector<32x1xf32> -> vector<32x1xf32>
    %102 = vector.broadcast %101 : vector<32x1xf32> to vector<32x256xf32>
    %103 = arith.subf %98, %102 : vector<32x256xf32>
    %104 = arith.mulf %103, %103 : vector<32x256xf32>
    %cst_34 = arith.constant dense<0.000000e+00> : vector<32xf32>
    %105 = vector.multi_reduction <add>, %104, %cst_34 [1] : vector<32x256xf32> to vector<32xf32>
    %106 = vector.shape_cast %105 : vector<32xf32> to vector<32x1xf32>
    %cst_35 = arith.constant dense<0.000000e+00> : vector<32x1xf32>
    %107 = tpu.matmul %15, %106, %cst_35 {dimension_numbers = #tpu.dot_dimension_numbers<[1], [0], [0], [1], [0, 0, 1, 1], [], []>} : vector<32x32xf32>, vector<32x1xf32>, vector<32x1xf32> -> vector<32x1xf32>
    %cst_36 = arith.constant 9.99999974E-6 : f32
    %108 = vector.broadcast %cst_36 : f32 to vector<32x1xf32>
    %109 = arith.addf %107, %108 : vector<32x1xf32>
    %110 = math.rsqrt %109 : vector<32x1xf32>
    %111 = arith.mulf %110, %12 : vector<32x1xf32>
    %112 = vector.broadcast %111 : vector<32x1xf32> to vector<32x256xf32>
    %113 = arith.mulf %103, %112 : vector<32x256xf32>
    %114 = vector.broadcast %13 : vector<32x1xf32> to vector<32x256xf32>
    %115 = arith.addf %113, %114 : vector<32x256xf32>
    %cst_37 = arith.constant 0.000000e+00 : f32
    %116 = vector.broadcast %cst_37 : f32 to vector<32x256xf32>
    %117 = arith.maximumf %115, %116 : vector<32x256xf32>
    %118 = arith.addf %26, %117 : vector<32x256xf32>
    %cst_38 = arith.constant 0.000000e+00 : f32
    %119 = vector.broadcast %cst_38 : f32 to vector<32x256xf32>
    %120 = arith.maximumf %118, %119 : vector<32x256xf32>
    %c0_39 = arith.constant 0 : index
    %c0_40 = arith.constant 0 : index
    %c0_41 = arith.constant 0 : index
    %121 = vector.load %arg10[%c0_39, %c0_40, %c0_41] : memref<2x32x256xf32, #tpu.memory_space<vmem>>, vector<1x32x256xf32>
    %122 = vector.shape_cast %121 : vector<1x32x256xf32> to vector<32x256xf32>
    %123 = vector.shape_cast %120 : vector<32x256xf32> to vector<1x32x256xf32>
    tpu.vector_store %arg10[%c0_39, %c0_40, %c0_41], %123 {strides = array<i32>} : memref<2x32x256xf32, #tpu.memory_space<vmem>>, vector<1x32x256xf32>,
    %c1 = arith.constant 1 : index
    %c0_42 = arith.constant 0 : index
    %c0_43 = arith.constant 0 : index
    %124 = vector.load %arg1[%c1, %c0_42, %c0_43] : memref<2x32x256xf32, #tpu.memory_space<vmem>>, vector<1x32x256xf32>
    %125 = vector.shape_cast %124 : vector<1x32x256xf32> to vector<32x256xf32>
    %cst_44 = arith.constant dense<0.000000e+00> : vector<8x256xf32>
    %126 = tpu.matmul %0, %125, %cst_44 {dimension_numbers = #tpu.dot_dimension_numbers<[1], [0], [0], [1], [0, 0, 1, 1], [], []>} : vector<8x32xf32>, vector<32x256xf32>, vector<8x256xf32> -> vector<8x256xf32>
    %127 = vector.broadcast %5 : vector<8x1xf32> to vector<8x256xf32>
    %128 = arith.addf %126, %127 : vector<8x256xf32>
    %cst_45 = arith.constant dense<0.000000e+00> : vector<8xf32>
    %129 = vector.multi_reduction <add>, %128, %cst_45 [1] : vector<8x256xf32> to vector<8xf32>
    %130 = vector.shape_cast %129 : vector<8xf32> to vector<8x1xf32>
    %cst_46 = arith.constant dense<0.000000e+00> : vector<8x1xf32>
    %131 = tpu.matmul %14, %130, %cst_46 {dimension_numbers = #tpu.dot_dimension_numbers<[1], [0], [0], [1], [0, 0, 1, 1], [], []>} : vector<8x8xf32>, vector<8x1xf32>, vector<8x1xf32> -> vector<8x1xf32>
    %132 = vector.broadcast %131 : vector<8x1xf32> to vector<8x256xf32>
    %133 = arith.subf %128, %132 : vector<8x256xf32>
    %134 = arith.mulf %133, %133 : vector<8x256xf32>
    %cst_47 = arith.constant dense<0.000000e+00> : vector<8xf32>
    %135 = vector.multi_reduction <add>, %134, %cst_47 [1] : vector<8x256xf32> to vector<8xf32>
    %136 = vector.shape_cast %135 : vector<8xf32> to vector<8x1xf32>
    %cst_48 = arith.constant dense<0.000000e+00> : vector<8x1xf32>
    %137 = tpu.matmul %14, %136, %cst_48 {dimension_numbers = #tpu.dot_dimension_numbers<[1], [0], [0], [1], [0, 0, 1, 1], [], []>} : vector<8x8xf32>, vector<8x1xf32>, vector<8x1xf32> -> vector<8x1xf32>
    %cst_49 = arith.constant 9.99999974E-6 : f32
    %138 = vector.broadcast %cst_49 : f32 to vector<8x1xf32>
    %139 = arith.addf %137, %138 : vector<8x1xf32>
    %140 = math.rsqrt %139 : vector<8x1xf32>
    %141 = arith.mulf %140, %6 : vector<8x1xf32>
    %142 = vector.broadcast %141 : vector<8x1xf32> to vector<8x256xf32>
    %143 = arith.mulf %133, %142 : vector<8x256xf32>
    %144 = vector.broadcast %7 : vector<8x1xf32> to vector<8x256xf32>
    %145 = arith.addf %143, %144 : vector<8x256xf32>
    %cst_50 = arith.constant 0.000000e+00 : f32
    %146 = vector.broadcast %cst_50 : f32 to vector<8x256xf32>
    %147 = arith.maximumf %145, %146 : vector<8x256xf32>
    %c17_i32_51 = arith.constant 17 : i32
    %148 = tpu.dynamic_rotate %147 by %c17_i32_51 dim 1 : vector<8x256xf32>, i32 -> vector<8x256xf32>
    %149 = vector.broadcast %17 : vector<1x256xf32> to vector<8x256xf32>
    %150 = arith.mulf %148, %149 : vector<8x256xf32>
    %c16_i32_52 = arith.constant 16 : i32
    %151 = tpu.dynamic_rotate %147 by %c16_i32_52 dim 1 : vector<8x256xf32>, i32 -> vector<8x256xf32>
    %152 = vector.broadcast %18 : vector<1x256xf32> to vector<8x256xf32>
    %153 = arith.mulf %151, %152 : vector<8x256xf32>
    %c15_i32_53 = arith.constant 15 : i32
    %154 = tpu.dynamic_rotate %147 by %c15_i32_53 dim 1 : vector<8x256xf32>, i32 -> vector<8x256xf32>
    %155 = vector.broadcast %19 : vector<1x256xf32> to vector<8x256xf32>
    %156 = arith.mulf %154, %155 : vector<8x256xf32>
    %c1_i32_54 = arith.constant 1 : i32
    %157 = tpu.dynamic_rotate %147 by %c1_i32_54 dim 1 : vector<8x256xf32>, i32 -> vector<8x256xf32>
    %158 = vector.broadcast %20 : vector<1x256xf32> to vector<8x256xf32>
    %159 = arith.mulf %157, %158 : vector<8x256xf32>
    %c255_i32_55 = arith.constant 255 : i32
    %160 = tpu.dynamic_rotate %147 by %c255_i32_55 dim 1 : vector<8x256xf32>, i32 -> vector<8x256xf32>
    %161 = vector.broadcast %21 : vector<1x256xf32> to vector<8x256xf32>
    %162 = arith.mulf %160, %161 : vector<8x256xf32>
    %c241_i32_56 = arith.constant 241 : i32
    %163 = tpu.dynamic_rotate %147 by %c241_i32_56 dim 1 : vector<8x256xf32>, i32 -> vector<8x256xf32>
    %164 = vector.broadcast %22 : vector<1x256xf32> to vector<8x256xf32>
    %165 = arith.mulf %163, %164 : vector<8x256xf32>
    %c240_i32_57 = arith.constant 240 : i32
    %166 = tpu.dynamic_rotate %147 by %c240_i32_57 dim 1 : vector<8x256xf32>, i32 -> vector<8x256xf32>
    %167 = vector.broadcast %23 : vector<1x256xf32> to vector<8x256xf32>
    %168 = arith.mulf %166, %167 : vector<8x256xf32>
    %c239_i32_58 = arith.constant 239 : i32
    %169 = tpu.dynamic_rotate %147 by %c239_i32_58 dim 1 : vector<8x256xf32>, i32 -> vector<8x256xf32>
    %170 = vector.broadcast %24 : vector<1x256xf32> to vector<8x256xf32>
    %171 = arith.mulf %169, %170 : vector<8x256xf32>
    %172 = tpu.concatenate %150, %153, %156, %159, %147, %162, %165, %168, %171 in 0 : vector<8x256xf32>, vector<8x256xf32>, vector<8x256xf32>, vector<8x256xf32>, vector<8x256xf32>, vector<8x256xf32>, vector<8x256xf32>, vector<8x256xf32>, vector<8x256xf32> -> vector<72x256xf32>
    %cst_59 = arith.constant dense<0.000000e+00> : vector<8x256xf32>
    %173 = tpu.matmul %1, %172, %cst_59 {dimension_numbers = #tpu.dot_dimension_numbers<[1], [0], [0], [1], [0, 0, 1, 1], [], []>} : vector<8x72xf32>, vector<72x256xf32>, vector<8x256xf32> -> vector<8x256xf32>
    %174 = vector.broadcast %8 : vector<8x1xf32> to vector<8x256xf32>
    %175 = arith.addf %173, %174 : vector<8x256xf32>
    %cst_60 = arith.constant dense<0.000000e+00> : vector<8xf32>
    %176 = vector.multi_reduction <add>, %175, %cst_60 [1] : vector<8x256xf32> to vector<8xf32>
    %177 = vector.shape_cast %176 : vector<8xf32> to vector<8x1xf32>
    %cst_61 = arith.constant dense<0.000000e+00> : vector<8x1xf32>
    %178 = tpu.matmul %14, %177, %cst_61 {dimension_numbers = #tpu.dot_dimension_numbers<[1], [0], [0], [1], [0, 0, 1, 1], [], []>} : vector<8x8xf32>, vector<8x1xf32>, vector<8x1xf32> -> vector<8x1xf32>
    %179 = vector.broadcast %178 : vector<8x1xf32> to vector<8x256xf32>
    %180 = arith.subf %175, %179 : vector<8x256xf32>
    %181 = arith.mulf %180, %180 : vector<8x256xf32>
    %cst_62 = arith.constant dense<0.000000e+00> : vector<8xf32>
    %182 = vector.multi_reduction <add>, %181, %cst_62 [1] : vector<8x256xf32> to vector<8xf32>
    %183 = vector.shape_cast %182 : vector<8xf32> to vector<8x1xf32>
    %cst_63 = arith.constant dense<0.000000e+00> : vector<8x1xf32>
    %184 = tpu.matmul %14, %183, %cst_63 {dimension_numbers = #tpu.dot_dimension_numbers<[1], [0], [0], [1], [0, 0, 1, 1], [], []>} : vector<8x8xf32>, vector<8x1xf32>, vector<8x1xf32> -> vector<8x1xf32>
    %cst_64 = arith.constant 9.99999974E-6 : f32
    %185 = vector.broadcast %cst_64 : f32 to vector<8x1xf32>
    %186 = arith.addf %184, %185 : vector<8x1xf32>
    %187 = math.rsqrt %186 : vector<8x1xf32>
    %188 = arith.mulf %187, %9 : vector<8x1xf32>
    %189 = vector.broadcast %188 : vector<8x1xf32> to vector<8x256xf32>
    %190 = arith.mulf %180, %189 : vector<8x256xf32>
    %191 = vector.broadcast %10 : vector<8x1xf32> to vector<8x256xf32>
    %192 = arith.addf %190, %191 : vector<8x256xf32>
    %cst_65 = arith.constant 0.000000e+00 : f32
    %193 = vector.broadcast %cst_65 : f32 to vector<8x256xf32>
    %194 = arith.maximumf %192, %193 : vector<8x256xf32>
    %cst_66 = arith.constant dense<0.000000e+00> : vector<32x256xf32>
    %195 = tpu.matmul %2, %194, %cst_66 {dimension_numbers = #tpu.dot_dimension_numbers<[1], [0], [0], [1], [0, 0, 1, 1], [], []>} : vector<32x8xf32>, vector<8x256xf32>, vector<32x256xf32> -> vector<32x256xf32>
    %196 = vector.broadcast %11 : vector<32x1xf32> to vector<32x256xf32>
    %197 = arith.addf %195, %196 : vector<32x256xf32>
    %cst_67 = arith.constant dense<0.000000e+00> : vector<32xf32>
    %198 = vector.multi_reduction <add>, %197, %cst_67 [1] : vector<32x256xf32> to vector<32xf32>
    %199 = vector.shape_cast %198 : vector<32xf32> to vector<32x1xf32>
    %cst_68 = arith.constant dense<0.000000e+00> : vector<32x1xf32>
    %200 = tpu.matmul %15, %199, %cst_68 {dimension_numbers = #tpu.dot_dimension_numbers<[1], [0], [0], [1], [0, 0, 1, 1], [], []>} : vector<32x32xf32>, vector<32x1xf32>, vector<32x1xf32> -> vector<32x1xf32>
    %201 = vector.broadcast %200 : vector<32x1xf32> to vector<32x256xf32>
    %202 = arith.subf %197, %201 : vector<32x256xf32>
    %203 = arith.mulf %202, %202 : vector<32x256xf32>
    %cst_69 = arith.constant dense<0.000000e+00> : vector<32xf32>
    %204 = vector.multi_reduction <add>, %203, %cst_69 [1] : vector<32x256xf32> to vector<32xf32>
    %205 = vector.shape_cast %204 : vector<32xf32> to vector<32x1xf32>
    %cst_70 = arith.constant dense<0.000000e+00> : vector<32x1xf32>
    %206 = tpu.matmul %15, %205, %cst_70 {dimension_numbers = #tpu.dot_dimension_numbers<[1], [0], [0], [1], [0, 0, 1, 1], [], []>} : vector<32x32xf32>, vector<32x1xf32>, vector<32x1xf32> -> vector<32x1xf32>
    %cst_71 = arith.constant 9.99999974E-6 : f32
    %207 = vector.broadcast %cst_71 : f32 to vector<32x1xf32>
    %208 = arith.addf %206, %207 : vector<32x1xf32>
    %209 = math.rsqrt %208 : vector<32x1xf32>
    %210 = arith.mulf %209, %12 : vector<32x1xf32>
    %211 = vector.broadcast %210 : vector<32x1xf32> to vector<32x256xf32>
    %212 = arith.mulf %202, %211 : vector<32x256xf32>
    %213 = vector.broadcast %13 : vector<32x1xf32> to vector<32x256xf32>
    %214 = arith.addf %212, %213 : vector<32x256xf32>
    %cst_72 = arith.constant 0.000000e+00 : f32
    %215 = vector.broadcast %cst_72 : f32 to vector<32x256xf32>
    %216 = arith.maximumf %214, %215 : vector<32x256xf32>
    %217 = arith.addf %125, %216 : vector<32x256xf32>
    %cst_73 = arith.constant 0.000000e+00 : f32
    %218 = vector.broadcast %cst_73 : f32 to vector<32x256xf32>
    %219 = arith.maximumf %217, %218 : vector<32x256xf32>
    %c1_74 = arith.constant 1 : index
    %c0_75 = arith.constant 0 : index
    %c0_76 = arith.constant 0 : index
    %220 = vector.load %arg10[%c1_74, %c0_75, %c0_76] : memref<2x32x256xf32, #tpu.memory_space<vmem>>, vector<1x32x256xf32>
    %221 = vector.shape_cast %220 : vector<1x32x256xf32> to vector<32x256xf32>
    %222 = vector.shape_cast %219 : vector<32x256xf32> to vector<1x32x256xf32>
    tpu.vector_store %arg10[%c1_74, %c0_75, %c0_76], %222 {strides = array<i32>} : memref<2x32x256xf32, #tpu.memory_space<vmem>>, vector<1x32x256xf32>,
    return
  }
  func.func @transform_0(%arg0: i32) -> (i32, i32, i32) {
    %c0_i32 = arith.constant 0 : i32
    %c0_i32_0 = arith.constant 0 : i32
    %c0_i32_1 = arith.constant 0 : i32
    return %arg0, %c0_i32, %c0_i32_0 : i32, i32, i32
  }
  func.func @transform_1(%arg0: i32) -> (i32, i32) {
    %c0_i32 = arith.constant 0 : i32
    %c0_i32_0 = arith.constant 0 : i32
    %c0_i32_1 = arith.constant 0 : i32
    return %c0_i32, %c0_i32_0 : i32, i32
  }
  func.func @transform_2(%arg0: i32) -> (i32, i32) {
    %c0_i32 = arith.constant 0 : i32
    %c0_i32_0 = arith.constant 0 : i32
    %c0_i32_1 = arith.constant 0 : i32
    return %c0_i32, %c0_i32_0 : i32, i32
  }
  func.func @transform_3(%arg0: i32) -> (i32, i32) {
    %c0_i32 = arith.constant 0 : i32
    %c0_i32_0 = arith.constant 0 : i32
    %c0_i32_1 = arith.constant 0 : i32
    return %c0_i32, %c0_i32_0 : i32, i32
  }
  func.func @transform_4(%arg0: i32) -> (i32, i32) {
    %c0_i32 = arith.constant 0 : i32
    %c0_i32_0 = arith.constant 0 : i32
    %c0_i32_1 = arith.constant 0 : i32
    return %c0_i32, %c0_i32_0 : i32, i32
  }
  func.func @transform_5(%arg0: i32) -> (i32, i32) {
    %c0_i32 = arith.constant 0 : i32
    %c0_i32_0 = arith.constant 0 : i32
    %c0_i32_1 = arith.constant 0 : i32
    return %c0_i32, %c0_i32_0 : i32, i32
  }
  func.func @transform_6(%arg0: i32) -> (i32, i32) {
    %c0_i32 = arith.constant 0 : i32
    %c0_i32_0 = arith.constant 0 : i32
    %c0_i32_1 = arith.constant 0 : i32
    return %c0_i32, %c0_i32_0 : i32, i32
  }
  func.func @transform_7(%arg0: i32) -> (i32, i32) {
    %c0_i32 = arith.constant 0 : i32
    %c0_i32_0 = arith.constant 0 : i32
    %c0_i32_1 = arith.constant 0 : i32
    return %c0_i32, %c0_i32_0 : i32, i32
  }
  func.func @transform_8(%arg0: i32) -> (i32, i32) {
    %c0_i32 = arith.constant 0 : i32
    %c0_i32_0 = arith.constant 0 : i32
    %c0_i32_1 = arith.constant 0 : i32
    return %c0_i32, %c0_i32_0 : i32, i32
  }
  func.func @transform_9(%arg0: i32) -> (i32, i32, i32) {
    %c0_i32 = arith.constant 0 : i32
    %c0_i32_0 = arith.constant 0 : i32
    %c0_i32_1 = arith.constant 0 : i32
    return %arg0, %c0_i32, %c0_i32_0 : i32, i32, i32
  }
}

</mosaic_0001>

<llo_original>
// kernel: tpu_custom_call.1
$region0: #{tpu_custom_call.1}
  #allocation0 [shape = 'u32[]', space=smem, size = 0x4, offset = 0x4, fixed_abs, tag = 'smem constant byte address 0x4 - core index']
  #allocation1 [shape = 'u32[144,128]{1,0:T(1,128)}', space=vmem, size = 0x12000, scoped, tag = 'internal scratch']
  %s0 = inlined_call_operand.hbm [shape: f32[2,32,256], index: 0, kind: input, shape index: {}]
  %s1 = inlined_call_operand.vmem [shape: f32[8,32], index: 1, kind: input, shape index: {}]
  %s2 = inlined_call_operand.vmem [shape: f32[8,72], index: 2, kind: input, shape index: {}]
  %s3 = inlined_call_operand.vmem [shape: f32[32,8], index: 3, kind: input, shape index: {}]
  %s4 = inlined_call_operand.vmem [shape: f32[8,6], index: 4, kind: input, shape index: {}]
  %s5 = inlined_call_operand.vmem [shape: f32[32,3], index: 5, kind: input, shape index: {}]
  %s6 = inlined_call_operand.vmem [shape: f32[8,8], index: 6, kind: input, shape index: {}]
  %s7 = inlined_call_operand.vmem [shape: f32[32,32], index: 7, kind: input, shape index: {}]
  %s8 = inlined_call_operand.vmem [shape: f32[8,256], index: 8, kind: input, shape index: {}]
  %s9 = inlined_call_operand.hbm [shape: f32[2,32,256], index: 9, kind: output, shape index: {}]
  %s10 = sld [smem:[#allocation0]]
  $region50: #{tpu_custom_call.1} parent=0
    _
  %s12 = ssub.s32 1, %s10
  %s13 = scalar_select 0, %s12, %s10
  $region1: #{tpu_custom_call.1} parent=0
    #allocation2 [shape = 'u8[65536]{0}', space=vmem, size = 0x10000, scoped, tag = 'input window, operand 0, single buffered']
    #allocation3 [shape = 's32[1]{0}', space=sflag, size = 0x4, scoped, tag = 'scoped memory for tpu_custom_call.1']
    #allocation4 [shape = 's32[1]{0}', space=sflag, size = 0x4, scoped, tag = 'scoped memory for tpu_custom_call.1']
    #allocation5 [shape = 'u8[65536]{0}', space=vmem, size = 0x10000, scoped, tag = 'output window, operand 0, single buffered']
    %14 = vsyncpa [#allocation3], 0
    %15 = vsyncpa [#allocation4], 0
    // Predicated region
    $region2: #{tpu_custom_call.1} parent=1 // pred_check
      _
    $region3: #{tpu_custom_call.1} parent=1 // pred_check_branch
      %17 = sbr.rel (0) target = $region5
    $region4: #{tpu_custom_call.1} parent=1 // pred_region
      %s19 = ssub.s32 2048, 2048
      %20 = vsyncadd [#allocation3], %s19
      %s21 = sshll.u32 [#allocation2], 4
      %s22 = int_to_ptr.vmem [resolvable:$true] %s21
      %27 = dma.hbm_to_vmem [thread:$0]  %s0, 2048, %s22, [#allocation3], 256, 256, 16
    $region5: #{tpu_custom_call.1} parent=1 // pred_fallthru
      _
    // Predicated region
    $region6: #{tpu_custom_call.1} parent=1 // pred_check
      _
    $region7: #{tpu_custom_call.1} parent=1 // pred_check_branch
      %29 = sbr.rel (0) target = $region9
    $region8: #{tpu_custom_call.1} parent=1 // pred_region
      _
    $region9: #{tpu_custom_call.1} parent=1 // pred_fallthru
      _
    // Predicated region
    $region10: #{tpu_custom_call.1} parent=1 // pred_check
      _
    $region11: #{tpu_custom_call.1} parent=1 // pred_check_branch
      %31 = sbr.rel (0) target = $region13
    $region12: #{tpu_custom_call.1} parent=1 // pred_region
      _
    $region13: #{tpu_custom_call.1} parent=1 // pred_fallthru
      _
    // Predicated region
    $region14: #{tpu_custom_call.1} parent=1 // pred_check
      _
    $region15: #{tpu_custom_call.1} parent=1 // pred_check_branch
      %33 = sbr.rel (0) target = $region17
    $region16: #{tpu_custom_call.1} parent=1 // pred_region
      _
    $region17: #{tpu_custom_call.1} parent=1 // pred_fallthru
      _
    // Predicated region
    $region18: #{tpu_custom_call.1} parent=1 // pred_check
      _
    $region19: #{tpu_custom_call.1} parent=1 // pred_check_branch
      %35 = sbr.rel (0) target = $region21
    $region20: #{tpu_custom_call.1} parent=1 // pred_region
      _
    $region21: #{tpu_custom_call.1} parent=1 // pred_fallthru
      _
    // Predicated region
    $region22: #{tpu_custom_call.1} parent=1 // pred_check
      _
    $region23: #{tpu_custom_call.1} parent=1 // pred_check_branch
      %37 = sbr.rel (0) target = $region25
    $region24: #{tpu_custom_call.1} parent=1 // pred_region
      _
    $region25: #{tpu_custom_call.1} parent=1 // pred_fallthru
      _
    // Predicated region
    $region26: #{tpu_custom_call.1} parent=1 // pred_check
      _
    $region27: #{tpu_custom_call.1} parent=1 // pred_check_branch
      %39 = sbr.rel (0) target = $region29
    $region28: #{tpu_custom_call.1} parent=1 // pred_region
      _
    $region29: #{tpu_custom_call.1} parent=1 // pred_fallthru
      _
    // Predicated region
    $region30: #{tpu_custom_call.1} parent=1 // pred_check
      _
    $region31: #{tpu_custom_call.1} parent=1 // pred_check_branch
      %41 = sbr.rel (0) target = $region33
    $region32: #{tpu_custom_call.1} parent=1 // pred_region
      _
    $region33: #{tpu_custom_call.1} parent=1 // pred_fallthru
      _
    // Predicated region
    $region34: #{tpu_custom_call.1} parent=1 // pred_check
      _
    $region35: #{tpu_custom_call.1} parent=1 // pred_check_branch
      %43 = sbr.rel (0) target = $region37
    $region36: #{tpu_custom_call.1} parent=1 // pred_region
      _
    $region37: #{tpu_custom_call.1} parent=1 // pred_fallthru
      _
    // Predicated region
    $region38: #{tpu_custom_call.1} parent=1 // pred_check
      _
    $region39: #{tpu_custom_call.1} parent=1 // pred_check_branch
      %45 = sbr.rel (0) target = $region41
    $region40: #{tpu_custom_call.1} parent=1 // pred_region
      %46 = dma.done [#allocation3], 2048
    $region41: #{tpu_custom_call.1} parent=1 // pred_fallthru
      _
    %v47 = vld [vmem:[%s1] sm:$0xff]
    %v48 = vld [vmem:[%s2] sm:$0xff]
    %v49 = vld [vmem:[%s3] sm:$0xff]
    %v50 = vld [vmem:[%s3 + $0x8] sm:$0xff]
    %v51 = vld [vmem:[%s3 + $0x10] sm:$0xff]
    %v52 = vld [vmem:[%s3 + $0x18] sm:$0xff]
    %v53 = vld [vmem:[%s4] sm:$0xff]
    %v54 = vld [vmem:[%s5] sm:$0xff]
    %v55 = vld [vmem:[%s5 + $0x8] sm:$0xff]
    %v56 = vld [vmem:[%s5 + $0x10] sm:$0xff]
    %v57 = vld [vmem:[%s5 + $0x18] sm:$0xff]
    %v58 = vld [vmem:[%s6] sm:$0xff]
    %v59 = vld [vmem:[%s7] sm:$0xff]
    %v60 = vld [vmem:[%s7 + $0x8] sm:$0xff]
    %v61 = vld [vmem:[%s7 + $0x10] sm:$0xff]
    %v62 = vld [vmem:[%s7 + $0x18] sm:$0xff]
    %v63 = vld [vmem:[%s8] sm:$0xff]
    %v64 = vld [vmem:[%s8 + $0x8] sm:$0xff]
    %v65 = vld [vmem:[#allocation2] sm:$0xff]
    %v66 = vld [vmem:[#allocation2 + $0x8] sm:$0xff]
    %v67 = vld [vmem:[#allocation2 + $0x10] sm:$0xff]
    %v68 = vld [vmem:[#allocation2 + $0x18] sm:$0xff]
    %v69 = vld [vmem:[#allocation2 + $0x20] sm:$0xff]
    %v70 = vld [vmem:[#allocation2 + $0x28] sm:$0xff]
    %v71 = vld [vmem:[#allocation2 + $0x30] sm:$0xff]
    %v72 = vld [vmem:[#allocation2 + $0x38] sm:$0xff]
    %74 = vset.pattern.permute.xlu0 0
    %75 = vperm.xlu0 %74, %v53
    %v76 = vpop.permute.xlu0 %75
    %vm78 = vcmask 261120
    %v80 = vsel %vm78, %v47, 0
    %82 = vmatprep.subr.mxu0 %v66
    %83 = vmatpush1.msra.mxu0 %v65
    %84 = vmatprep.subr.mxu0 %v68
    %85 = vmatpush1.msra.mxu0 %v67
    %86 = vmatprep.subr.mxu0 %v70
    %87 = vmatpush1.msra.mxu0 %v69
    %88 = vmatprep.subr.mxu0 %v72
    %89 = vmatpush1.msra.mxu0 %v71
    %90 = vmatprep.subr.mxu0 0.0
    %91 = vmatpush1.msra.mxu0 0.0
    %92 = vmatprep.subr.mxu0 0.0
    %93 = vmatpush1.msra.mxu0 0.0
    %94 = vmatprep.subr.mxu0 0.0
    %95 = vmatpush1.msra.mxu0 0.0
    %96 = vmatprep.subr.mxu0 0.0
    %97 = vmatpush1.msra.mxu0 0.0
    %98 = vmatprep.subr.mxu0 0.0
    %99 = vmatpush1.msra.mxu0 0.0
    %100 = vmatprep.subr.mxu0 0.0
    %101 = vmatpush1.msra.mxu0 0.0
    %102 = vmatprep.subr.mxu0 0.0
    %103 = vmatpush1.msra.mxu0 0.0
    %104 = vmatprep.subr.mxu0 0.0
    %105 = vmatpush1.msra.mxu0 0.0
    %106 = vmatprep.subr.mxu0 0.0
    %107 = vmatpush1.msra.mxu0 0.0
    %108 = vmatprep.subr.mxu0 0.0
    %109 = vmatpush1.msra.mxu0 0.0
    %110 = vmatprep.subr.mxu0 0.0
    %111 = vmatpush1.msra.mxu0 0.0
    %112 = vmatprep.subr.mxu0 0.0
    %113 = vmatpush1.msra.mxu0 0.0
    %114 = vmatprep.subr.mxu0 0.0
    %115 = vmatpush1.msra.mxu0 0.0
    %116 = vmatprep.subr.mxu0 0.0
    %117 = vmatpush1.msra.mxu0 0.0
    %118 = vmatprep.subr.mxu0 0.0
    %119 = vmatpush1.msra.mxu0 0.0
    %120 = vmatprep.subr.mxu0 0.0
    %121 = vmatpush1.msra.mxu0 0.0
    %122 = vmatprep.subr.mxu0 0.0
    %123 = vmatpush1.msra.mxu0 0.0
    %124 = vmatprep.subr.mxu0 0.0
    %125 = vmatpush1.msra.mxu0 0.0
    %126 = vmatprep.subr.mxu0 0.0
    %127 = vmatpush1.msra.mxu0 0.0
    %128 = vmatprep.subr.mxu0 0.0
    %129 = vmatpush1.msra.mxu0 0.0
    %130 = vmatprep.subr.mxu0 0.0
    %131 = vmatpush1.msra.mxu0 0.0
    %132 = vmatprep.subr.mxu0 0.0
    %133 = vmatpush1.msra.mxu0 0.0
    %134 = vmatprep.subr.mxu0 0.0
    %135 = vmatpush1.msra.mxu0 0.0
    %136 = vmatprep.subr.mxu0 0.0
    %137 = vmatpush1.msra.mxu0 0.0
    %138 = vmatprep.subr.mxu0 0.0
    %139 = vmatpush1.msra.mxu0 0.0
    %140 = vmatprep.subr.mxu0 0.0
    %141 = vmatpush1.msra.mxu0 0.0
    %142 = vmatprep.subr.mxu0 0.0
    %143 = vmatpush1.msra.mxu0 0.0
    %144 = vmatprep.subr.mxu0 0.0
    %145 = vmatpush1.msra.mxu0 0.0
    %146 = vmatprep.mubr.f32.mxu0 0.0
    %147 = vmatmul.mubr.f32.gmra.mrb[0].mxu0 %v80
    %v148 = vpop.f32.mrb[0].mxu0
    %v149 = vadd.f32 %v76, %v148
    %v150 = vpop.f32.mrb[0].mxu0
    %v151 = vadd.f32 %v76, %v150
    %152 = vdwg.mxu0
    %v153 = vadd.f32 %v149, %v151
    %154 = vadd.xlane.f32.xlu0 %v153
    %v155 = vpop.xlane.xlu0 %154
    %vm156 = vcmask 64512
    %v158 = vsel %vm156, %v58, 0
    %160 = vmatprep.subr.mxu0 0.0
    %161 = vmatpush1.msra.mxu0 %v155
    %162 = vmatprep.subr.mxu0 0.0
    %163 = vmatpush1.msra.mxu0 0.0
    %164 = vmatprep.subr.mxu0 0.0
    %165 = vmatpush1.msra.mxu0 0.0
    %166 = vmatprep.subr.mxu0 0.0
    %167 = vmatpush1.msra.mxu0 0.0
    %168 = vmatprep.subr.mxu0 0.0
    %169 = vmatpush1.msra.mxu0 0.0
    %170 = vmatprep.subr.mxu0 0.0
    %171 = vmatpush1.msra.mxu0 0.0
    %172 = vmatprep.subr.mxu0 0.0
    %173 = vmatpush1.msra.mxu0 0.0
    %174 = vmatprep.subr.mxu0 0.0
    %175 = vmatpush1.msra.mxu0 0.0
    %176 = vmatprep.subr.mxu0 0.0
    %177 = vmatpush1.msra.mxu0 0.0
    %178 = vmatprep.subr.mxu0 0.0
    %179 = vmatpush1.msra.mxu0 0.0
    %180 = vmatprep.subr.mxu0 0.0
    %181 = vmatpush1.msra.mxu0 0.0
    %182 = vmatprep.subr.mxu0 0.0
    %183 = vmatpush1.msra.mxu0 0.0
    %184 = vmatprep.subr.mxu0 0.0
    %185 = vmatpush1.msra.mxu0 0.0
    %186 = vmatprep.subr.mxu0 0.0
    %187 = vmatpush1.msra.mxu0 0.0
    %188 = vmatprep.subr.mxu0 0.0
    %189 = vmatpush1.msra.mxu0 0.0
    %190 = vmatprep.subr.mxu0 0.0
    %191 = vmatpush1.msra.mxu0 0.0
    %192 = vmatprep.subr.mxu0 0.0
    %193 = vmatpush1.msra.mxu0 0.0
    %194 = vmatprep.subr.mxu0 0.0
    %195 = vmatpush1.msra.mxu0 0.0
    %196 = vmatprep.subr.mxu0 0.0
    %197 = vmatpush1.msra.mxu0 0.0
    %198 = vmatprep.subr.mxu0 0.0
    %199 = vmatpush1.msra.mxu0 0.0
    %200 = vmatprep.subr.mxu0 0.0
    %201 = vmatpush1.msra.mxu0 0.0
    %202 = vmatprep.subr.mxu0 0.0
    %203 = vmatpush1.msra.mxu0 0.0
    %204 = vmatprep.subr.mxu0 0.0
    %205 = vmatpush1.msra.mxu0 0.0
    %206 = vmatprep.subr.mxu0 0.0
    %207 = vmatpush1.msra.mxu0 0.0
    %208 = vmatprep.subr.mxu0 0.0
    %209 = vmatpush1.msra.mxu0 0.0
    %210 = vmatprep.subr.mxu0 0.0
    %211 = vmatpush1.msra.mxu0 0.0
    %212 = vmatprep.subr.mxu0 0.0
    %213 = vmatpush1.msra.mxu0 0.0
    %214 = vmatprep.subr.mxu0 0.0
    %215 = vmatpush1.msra.mxu0 0.0
    %216 = vmatprep.subr.mxu0 0.0
    %217 = vmatpush1.msra.mxu0 0.0
    %218 = vmatprep.subr.mxu0 0.0
    %219 = vmatpush1.msra.mxu0 0.0
    %220 = vmatprep.subr.mxu0 0.0
    %221 = vmatpush1.msra.mxu0 0.0
    %222 = vmatprep.subr.mxu0 0.0
    %223 = vmatpush1.msra.mxu0 0.0
    %224 = vmatprep.mubr.f32.mxu0 0.0
    %225 = vmatmul.mubr.f32.gmra.mrb[0].mxu0 %v158
    %v226 = vpop.f32.mrb[0].mxu0
    %v227 = vadd.f32 0.0, %v226
    %v228 = vpop.f32.mrb[0].mxu0
    %229 = vdwg.mxu0
    %231 = vset.pattern.permute.xlu0 0
    %232 = vperm.xlu0 %231, %v227
    %v233 = vpop.permute.xlu0 %232
    %v235 = vsub.f32 %v149, %v233
    %v236 = vsub.f32 %v151, %v233
    %v237 = vmul.f32 %v235, %v235
    %v238 = vmul.f32 %v236, %v236
    %v239 = vadd.f32 %v237, %v238
    %240 = vadd.xlane.f32.xlu0 %v239
    %v241 = vpop.xlane.xlu0 %240
    %242 = vmatprep.subr.mxu0 0.0
    %243 = vmatpush1.msra.mxu0 %v241
    %244 = vmatprep.subr.mxu0 0.0
    %245 = vmatpush1.msra.mxu0 0.0
    %246 = vmatprep.subr.mxu0 0.0
    %247 = vmatpush1.msra.mxu0 0.0
    %248 = vmatprep.subr.mxu0 0.0
    %249 = vmatpush1.msra.mxu0 0.0
    %250 = vmatprep.subr.mxu0 0.0
    %251 = vmatpush1.msra.mxu0 0.0
    %252 = vmatprep.subr.mxu0 0.0
    %253 = vmatpush1.msra.mxu0 0.0
    %254 = vmatprep.subr.mxu0 0.0
    %255 = vmatpush1.msra.mxu0 0.0
    %256 = vmatprep.subr.mxu0 0.0
    %257 = vmatpush1.msra.mxu0 0.0
    %258 = vmatprep.subr.mxu0 0.0
    %259 = vmatpush1.msra.mxu0 0.0
    %260 = vmatprep.subr.mxu0 0.0
    %261 = vmatpush1.msra.mxu0 0.0
    %262 = vmatprep.subr.mxu0 0.0
    %263 = vmatpush1.msra.mxu0 0.0
    %264 = vmatprep.subr.mxu0 0.0
    %265 = vmatpush1.msra.mxu0 0.0
    %266 = vmatprep.subr.mxu0 0.0
    %267 = vmatpush1.msra.mxu0 0.0
    %268 = vmatprep.subr.mxu0 0.0
    %269 = vmatpush1.msra.mxu0 0.0
    %270 = vmatprep.subr.mxu0 0.0
    %271 = vmatpush1.msra.mxu0 0.0
    %272 = vmatprep.subr.mxu0 0.0
    %273 = vmatpush1.msra.mxu0 0.0
    %274 = vmatprep.subr.mxu0 0.0
    %275 = vmatpush1.msra.mxu0 0.0
    %276 = vmatprep.subr.mxu0 0.0
    %277 = vmatpush1.msra.mxu0 0.0
    %278 = vmatprep.subr.mxu0 0.0
    %279 = vmatpush1.msra.mxu0 0.0
    %280 = vmatprep.subr.mxu0 0.0
    %281 = vmatpush1.msra.mxu0 0.0
    %282 = vmatprep.subr.mxu0 0.0
    %283 = vmatpush1.msra.mxu0 0.0
    %284 = vmatprep.subr.mxu0 0.0
    %285 = vmatpush1.msra.mxu0 0.0
    %286 = vmatprep.subr.mxu0 0.0
    %287 = vmatpush1.msra.mxu0 0.0
    %288 = vmatprep.subr.mxu0 0.0
    %289 = vmatpush1.msra.mxu0 0.0
    %290 = vmatprep.subr.mxu0 0.0
    %291 = vmatpush1.msra.mxu0 0.0
    %292 = vmatprep.subr.mxu0 0.0
    %293 = vmatpush1.msra.mxu0 0.0
    %294 = vmatprep.subr.mxu0 0.0
    %295 = vmatpush1.msra.mxu0 0.0
    %296 = vmatprep.subr.mxu0 0.0
    %297 = vmatpush1.msra.mxu0 0.0
    %298 = vmatprep.subr.mxu0 0.0
    %299 = vmatpush1.msra.mxu0 0.0
    %300 = vmatprep.subr.mxu0 0.0
    %301 = vmatpush1.msra.mxu0 0.0
    %302 = vmatprep.subr.mxu0 0.0
    %303 = vmatpush1.msra.mxu0 0.0
    %304 = vmatprep.subr.mxu0 0.0
    %305 = vmatpush1.msra.mxu0 0.0
    %306 = vmatprep.mubr.f32.mxu0 0.0
    %307 = vmatmul.mubr.f32.gmra.mrb[0].mxu0 %v158
    %v308 = vpop.f32.mrb[0].mxu0
    %v309 = vadd.f32 1e-05, %v308
    %v310 = vpop.f32.mrb[0].mxu0
    %311 = vdwg.mxu0
    %v312 = vrsqrt.pop %v309
    %313 = vrot.lane.b32.xlu0 %v53, 127
    %v314 = vpop.permute.xlu0 %313
    %v316 = vmul.f32 %v312, %v314
    %318 = vset.pattern.permute.xlu0 0
    %319 = vperm.xlu0 %318, %v316
    %v320 = vpop.permute.xlu0 %319
    %v322 = vmul.f32 %v235, %v320
    %v323 = vmul.f32 %v236, %v320
    %324 = vset.pattern.permute.xlu0 2
    %325 = vperm.xlu0 %324, %v53
    %v326 = vpop.permute.xlu0 %325
    %v328 = vadd.f32 %v322, %v326
    %v329 = vadd.f32 %v323, %v326
    %v330 = vmax.f32 %v328, 0.0
    %v331 = vmax.f32 %v329, 0.0
    %332 = vrot.lane.b32.xlu0 %v330, 17
    %v333 = vpop.permute.xlu0 %332
    %334 = vrot.lane.b32.xlu0 %v331, 17
    %v335 = vpop.permute.xlu0 %334
    %v336 = vlaneseq
    %v337 = vand.u32 %v336, 127
    %vm338 = vcmp.lt.s32.totalorder %v337, 17
    %v339 = vsel %vm338, %v333, %v335
    %v340 = vsel %vm338, %v335, %v333
    %v341 = vlaneseq
    %v342 = vshrl.u32 %v341, 7
    %v343 = vsub.s32 0, %v342
    %v344 = vrot.slane %v63, %v343
    %v345 = vlaneseq
    %v346 = vshrl.u32 %v345, 7
    %v347 = vsub.s32 0, %v346
    %v348 = vrot.slane %v64, %v347
    %v349 = vmul.f32 %v340, %v344
    %v350 = vmul.f32 %v339, %v348
    %351 = vrot.lane.b32.xlu0 %v330, 16
    %v352 = vpop.permute.xlu0 %351
    %353 = vrot.lane.b32.xlu0 %v331, 16
    %v354 = vpop.permute.xlu0 %353
    %vm355 = vcmp.lt.s32.totalorder %v337, 16
    %v356 = vsel %vm355, %v352, %v354
    %v357 = vsel %vm355, %v354, %v352
    %v358 = vlaneseq
    %v359 = vshrl.u32 %v358, 7
    %v360 = vsub.s32 1, %v359
    %v361 = vrot.slane %v63, %v360
    %v362 = vlaneseq
    %v363 = vshrl.u32 %v362, 7
    %v364 = vsub.s32 1, %v363
    %v365 = vrot.slane %v64, %v364
    %v366 = vmul.f32 %v357, %v361
    %v367 = vmul.f32 %v356, %v365
    %368 = vrot.lane.b32.xlu0 %v330, 15
    %v369 = vpop.permute.xlu0 %368
    %370 = vrot.lane.b32.xlu0 %v331, 15
    %v371 = vpop.permute.xlu0 %370
    %vm372 = vcmp.lt.s32.totalorder %v337, 15
    %v373 = vsel %vm372, %v369, %v371
    %v374 = vsel %vm372, %v371, %v369
    %v375 = vlaneseq
    %v376 = vshrl.u32 %v375, 7
    %v377 = vsub.s32 2, %v376
    %v378 = vrot.slane %v63, %v377
    %v379 = vlaneseq
    %v380 = vshrl.u32 %v379, 7
    %v381 = vsub.s32 2, %v380
    %v382 = vrot.slane %v64, %v381
    %v383 = vmul.f32 %v374, %v378
    %v384 = vmul.f32 %v373, %v382
    %385 = vrot.lane.b32.xlu0 %v330, 1
    %v386 = vpop.permute.xlu0 %385
    %387 = vrot.lane.b32.xlu0 %v331, 1
    %v388 = vpop.permute.xlu0 %387
    %vm389 = vcmp.lt.s32.totalorder %v337, 1
    %v390 = vsel %vm389, %v386, %v388
    %v391 = vsel %vm389, %v388, %v386
    %v392 = vlaneseq
    %v393 = vshrl.u32 %v392, 7
    %v394 = vsub.s32 3, %v393
    %v395 = vrot.slane %v63, %v394
    %v396 = vlaneseq
    %v397 = vshrl.u32 %v396, 7
    %v398 = vsub.s32 3, %v397
    %v399 = vrot.slane %v64, %v398
    %v400 = vmul.f32 %v391, %v395
    %v401 = vmul.f32 %v390, %v399
    %402 = vrot.lane.b32.xlu0 %v330, 127
    %v403 = vpop.permute.xlu0 %402
    %404 = vrot.lane.b32.xlu0 %v331, 127
    %v405 = vpop.permute.xlu0 %404
    %vm406 = vcmp.lt.s32.totalorder %v337, 127
    %v407 = vsel %vm406, %v403, %v405
    %v408 = vsel %vm406, %v405, %v403
    %v409 = vlaneseq
    %v410 = vshrl.u32 %v409, 7
    %v411 = vsub.s32 4, %v410
    %v412 = vrot.slane %v63, %v411
    %v413 = vlaneseq
    %v414 = vshrl.u32 %v413, 7
    %v415 = vsub.s32 4, %v414
    %v416 = vrot.slane %v64, %v415
    %v417 = vmul.f32 %v407, %v412
    %v418 = vmul.f32 %v408, %v416
    %419 = vrot.lane.b32.xlu0 %v330, 113
    %v420 = vpop.permute.xlu0 %419
    %421 = vrot.lane.b32.xlu0 %v331, 113
    %v422 = vpop.permute.xlu0 %421
    %vm423 = vcmp.lt.s32.totalorder %v337, 113
    %v424 = vsel %vm423, %v420, %v422
    %v425 = vsel %vm423, %v422, %v420
    %v426 = vlaneseq
    %v427 = vshrl.u32 %v426, 7
    %v428 = vsub.s32 5, %v427
    %v429 = vrot.slane %v63, %v428
    %v430 = vlaneseq
    %v431 = vshrl.u32 %v430, 7
    %v432 = vsub.s32 5, %v431
    %v433 = vrot.slane %v64, %v432
    %v434 = vmul.f32 %v424, %v429
    %v435 = vmul.f32 %v425, %v433
    %436 = vrot.lane.b32.xlu0 %v330, 112
    %v437 = vpop.permute.xlu0 %436
    %438 = vrot.lane.b32.xlu0 %v331, 112
    %v439 = vpop.permute.xlu0 %438
    %vm440 = vcmp.lt.s32.totalorder %v337, 112
    %v441 = vsel %vm440, %v437, %v439
    %v442 = vsel %vm440, %v439, %v437
    %v443 = vlaneseq
    %v444 = vshrl.u32 %v443, 7
    %v445 = vsub.s32 6, %v444
    %v446 = vrot.slane %v63, %v445
    %v447 = vlaneseq
    %v448 = vshrl.u32 %v447, 7
    %v449 = vsub.s32 6, %v448
    %v450 = vrot.slane %v64, %v449
    %v451 = vmul.f32 %v441, %v446
    %v452 = vmul.f32 %v442, %v450
    %453 = vrot.lane.b32.xlu0 %v330, 111
    %v454 = vpop.permute.xlu0 %453
    %455 = vrot.lane.b32.xlu0 %v331, 111
    %v456 = vpop.permute.xlu0 %455
    %vm457 = vcmp.lt.s32.totalorder %v337, 111
    %v458 = vsel %vm457, %v454, %v456
    %v459 = vsel %vm457, %v456, %v454
    %v460 = vlaneseq
    %v461 = vshrl.u32 %v460, 7
    %v462 = vsub.s32 7, %v461
    %v463 = vrot.slane %v63, %v462
    %v464 = vlaneseq
    %v465 = vshrl.u32 %v464, 7
    %v466 = vsub.s32 7, %v465
    %v467 = vrot.slane %v64, %v466
    %v468 = vmul.f32 %v458, %v463
    %v469 = vmul.f32 %v459, %v467
    %470 = vset.pattern.permute.xlu0 3
    %471 = vperm.xlu0 %470, %v53
    %v472 = vpop.permute.xlu0 %471
    %vm474 = vcmask 588800
    %v476 = vsel %vm474, %v48, 0
    %478 = vmatprep.subr.mxu0 %v350
    %479 = vmatpush1.msra.mxu0 %v349
    %480 = vmatprep.subr.mxu0 %v367
    %481 = vmatpush1.msra.mxu0 %v366
    %482 = vmatprep.subr.mxu0 %v384
    %483 = vmatpush1.msra.mxu0 %v383
    %484 = vmatprep.subr.mxu0 %v401
    %485 = vmatpush1.msra.mxu0 %v400
    %486 = vmatprep.subr.mxu0 %v331
    %487 = vmatpush1.msra.mxu0 %v330
    %488 = vmatprep.subr.mxu0 %v418
    %489 = vmatpush1.msra.mxu0 %v417
    %490 = vmatprep.subr.mxu0 %v435
    %491 = vmatpush1.msra.mxu0 %v434
    %492 = vmatprep.subr.mxu0 %v452
    %493 = vmatpush1.msra.mxu0 %v451
    %494 = vmatprep.subr.mxu0 %v469
    %495 = vmatpush1.msra.mxu0 %v468
    %496 = vmatprep.subr.mxu0 0.0
    %497 = vmatpush1.msra.mxu0 0.0
    %498 = vmatprep.subr.mxu0 0.0
    %499 = vmatpush1.msra.mxu0 0.0
    %500 = vmatprep.subr.mxu0 0.0
    %501 = vmatpush1.msra.mxu0 0.0
    %502 = vmatprep.subr.mxu0 0.0
    %503 = vmatpush1.msra.mxu0 0.0
    %504 = vmatprep.subr.mxu0 0.0
    %505 = vmatpush1.msra.mxu0 0.0
    %506 = vmatprep.subr.mxu0 0.0
    %507 = vmatpush1.msra.mxu0 0.0
    %508 = vmatprep.subr.mxu0 0.0
    %509 = vmatpush1.msra.mxu0 0.0
    %510 = vmatprep.subr.mxu0 0.0
    %511 = vmatpush1.msra.mxu0 0.0
    %512 = vmatprep.subr.mxu0 0.0
    %513 = vmatpush1.msra.mxu0 0.0
    %514 = vmatprep.subr.mxu0 0.0
    %515 = vmatpush1.msra.mxu0 0.0
    %516 = vmatprep.subr.mxu0 0.0
    %517 = vmatpush1.msra.mxu0 0.0
    %518 = vmatprep.subr.mxu0 0.0
    %519 = vmatpush1.msra.mxu0 0.0
    %520 = vmatprep.subr.mxu0 0.0
    %521 = vmatpush1.msra.mxu0 0.0
    %522 = vmatprep.subr.mxu0 0.0
    %523 = vmatpush1.msra.mxu0 0.0
    %524 = vmatprep.subr.mxu0 0.0
    %525 = vmatpush1.msra.mxu0 0.0
    %526 = vmatprep.subr.mxu0 0.0
    %527 = vmatpush1.msra.mxu0 0.0
    %528 = vmatprep.subr.mxu0 0.0
    %529 = vmatpush1.msra.mxu0 0.0
    %530 = vmatprep.subr.mxu0 0.0
    %531 = vmatpush1.msra.mxu0 0.0
    %532 = vmatprep.subr.mxu0 0.0
    %533 = vmatpush1.msra.mxu0 0.0
    %534 = vmatprep.subr.mxu0 0.0
    %535 = vmatpush1.msra.mxu0 0.0
    %536 = vmatprep.subr.mxu0 0.0
    %537 = vmatpush1.msra.mxu0 0.0
    %538 = vmatprep.subr.mxu0 0.0
    %539 = vmatpush1.msra.mxu0 0.0
    %540 = vmatprep.subr.mxu0 0.0
    %541 = vmatpush1.msra.mxu0 0.0
    %542 = vmatprep.mubr.f32.mxu0 0.0
    %543 = vmatmul.mubr.f32.gmra.mrb[0].mxu0 %v476
    %v544 = vpop.f32.mrb[0].mxu0
    %v545 = vadd.f32 %v472, %v544
    %v546 = vpop.f32.mrb[0].mxu0
    %v547 = vadd.f32 %v472, %v546
    %548 = vdwg.mxu0
    %v549 = vadd.f32 %v545, %v547
    %550 = vadd.xlane.f32.xlu0 %v549
    %v551 = vpop.xlane.xlu0 %550
    %552 = vmatprep.subr.mxu0 0.0
    %553 = vmatpush1.msra.mxu0 %v551
    %554 = vmatprep.subr.mxu0 0.0
    %555 = vmatpush1.msra.mxu0 0.0
    %556 = vmatprep.subr.mxu0 0.0
    %557 = vmatpush1.msra.mxu0 0.0
    %558 = vmatprep.subr.mxu0 0.0
    %559 = vmatpush1.msra.mxu0 0.0
    %560 = vmatprep.subr.mxu0 0.0
    %561 = vmatpush1.msra.mxu0 0.0
    %562 = vmatprep.subr.mxu0 0.0
    %563 = vmatpush1.msra.mxu0 0.0
    %564 = vmatprep.subr.mxu0 0.0
    %565 = vmatpush1.msra.mxu0 0.0
    %566 = vmatprep.subr.mxu0 0.0
    %567 = vmatpush1.msra.mxu0 0.0
    %568 = vmatprep.subr.mxu0 0.0
    %569 = vmatpush1.msra.mxu0 0.0
    %570 = vmatprep.subr.mxu0 0.0
    %571 = vmatpush1.msra.mxu0 0.0
    %572 = vmatprep.subr.mxu0 0.0
    %573 = vmatpush1.msra.mxu0 0.0
    %574 = vmatprep.subr.mxu0 0.0
    %575 = vmatpush1.msra.mxu0 0.0
    %576 = vmatprep.subr.mxu0 0.0
    %577 = vmatpush1.msra.mxu0 0.0
    %578 = vmatprep.subr.mxu0 0.0
    %579 = vmatpush1.msra.mxu0 0.0
    %580 = vmatprep.subr.mxu0 0.0
    %581 = vmatpush1.msra.mxu0 0.0
    %582 = vmatprep.subr.mxu0 0.0
    %583 = vmatpush1.msra.mxu0 0.0
    %584 = vmatprep.subr.mxu0 0.0
    %585 = vmatpush1.msra.mxu0 0.0
    %586 = vmatprep.subr.mxu0 0.0
    %587 = vmatpush1.msra.mxu0 0.0
    %588 = vmatprep.subr.mxu0 0.0
    %589 = vmatpush1.msra.mxu0 0.0
    %590 = vmatprep.subr.mxu0 0.0
    %591 = vmatpush1.msra.mxu0 0.0
    %592 = vmatprep.subr.mxu0 0.0
    %593 = vmatpush1.msra.mxu0 0.0
    %594 = vmatprep.subr.mxu0 0.0
    %595 = vmatpush1.msra.mxu0 0.0
    %596 = vmatprep.subr.mxu0 0.0
    %597 = vmatpush1.msra.mxu0 0.0
    %598 = vmatprep.subr.mxu0 0.0
    %599 = vmatpush1.msra.mxu0 0.0
    %600 = vmatprep.subr.mxu0 0.0
    %601 = vmatpush1.msra.mxu0 0.0
    %602 = vmatprep.subr.mxu0 0.0
    %603 = vmatpush1.msra.mxu0 0.0
    %604 = vmatprep.subr.mxu0 0.0
    %605 = vmatpush1.msra.mxu0 0.0
    %606 = vmatprep.subr.mxu0 0.0
    %607 = vmatpush1.msra.mxu0 0.0
    %608 = vmatprep.subr.mxu0 0.0
    %609 = vmatpush1.msra.mxu0 0.0
    %610 = vmatprep.subr.mxu0 0.0
    %611 = vmatpush1.msra.mxu0 0.0
    %612 = vmatprep.subr.mxu0 0.0
    %613 = vmatpush1.msra.mxu0 0.0
    %614 = vmatprep.subr.mxu0 0.0
    %615 = vmatpush1.msra.mxu0 0.0
    %616 = vmatprep.mubr.f32.mxu0 0.0
    %617 = vmatmul.mubr.f32.gmra.mrb[0].mxu0 %v158
    %v618 = vpop.f32.mrb[0].mxu0
    %v619 = vadd.f32 0.0, %v618
    %v620 = vpop.f32.mrb[0].mxu0
    %621 = vdwg.mxu0
    %623 = vset.pattern.permute.xlu0 0
    %624 = vperm.xlu0 %623, %v619
    %v625 = vpop.permute.xlu0 %624
    %v627 = vsub.f32 %v545, %v625
    %v628 = vsub.f32 %v547, %v625
    %v629 = vmul.f32 %v627, %v627
    %v630 = vmul.f32 %v628, %v628
    %v631 = vadd.f32 %v629, %v630
    %632 = vadd.xlane.f32.xlu0 %v631
    %v633 = vpop.xlane.xlu0 %632
    %634 = vmatprep.subr.mxu0 0.0
    %635 = vmatpush1.msra.mxu0 %v633
    %636 = vmatprep.subr.mxu0 0.0
    %637 = vmatpush1.msra.mxu0 0.0
    %638 = vmatprep.subr.mxu0 0.0
    %639 = vmatpush1.msra.mxu0 0.0
    %640 = vmatprep.subr.mxu0 0.0
    %641 = vmatpush1.msra.mxu0 0.0
    %642 = vmatprep.subr.mxu0 0.0
    %643 = vmatpush1.msra.mxu0 0.0
    %644 = vmatprep.subr.mxu0 0.0
    %645 = vmatpush1.msra.mxu0 0.0
    %646 = vmatprep.subr.mxu0 0.0
    %647 = vmatpush1.msra.mxu0 0.0
    %648 = vmatprep.subr.mxu0 0.0
    %649 = vmatpush1.msra.mxu0 0.0
    %650 = vmatprep.subr.mxu0 0.0
    %651 = vmatpush1.msra.mxu0 0.0
    %652 = vmatprep.subr.mxu0 0.0
    %653 = vmatpush1.msra.mxu0 0.0
    %654 = vmatprep.subr.mxu0 0.0
    %655 = vmatpush1.msra.mxu0 0.0
    %656 = vmatprep.subr.mxu0 0.0
    %657 = vmatpush1.msra.mxu0 0.0
    %658 = vmatprep.subr.mxu0 0.0
    %659 = vmatpush1.msra.mxu0 0.0
    %660 = vmatprep.subr.mxu0 0.0
    %661 = vmatpush1.msra.mxu0 0.0
    %662 = vmatprep.subr.mxu0 0.0
    %663 = vmatpush1.msra.mxu0 0.0
    %664 = vmatprep.subr.mxu0 0.0
    %665 = vmatpush1.msra.mxu0 0.0
    %666 = vmatprep.subr.mxu0 0.0
    %667 = vmatpush1.msra.mxu0 0.0
    %668 = vmatprep.subr.mxu0 0.0
    %669 = vmatpush1.msra.mxu0 0.0
    %670 = vmatprep.subr.mxu0 0.0
    %671 = vmatpush1.msra.mxu0 0.0
    %672 = vmatprep.subr.mxu0 0.0
    %673 = vmatpush1.msra.mxu0 0.0
    %674 = vmatprep.subr.mxu0 0.0
    %675 = vmatpush1.msra.mxu0 0.0
    %676 = vmatprep.subr.mxu0 0.0
    %677 = vmatpush1.msra.mxu0 0.0
    %678 = vmatprep.subr.mxu0 0.0
    %679 = vmatpush1.msra.mxu0 0.0
    %680 = vmatprep.subr.mxu0 0.0
    %681 = vmatpush1.msra.mxu0 0.0
    %682 = vmatprep.subr.mxu0 0.0
    %683 = vmatpush1.msra.mxu0 0.0
    %684 = vmatprep.subr.mxu0 0.0
    %685 = vmatpush1.msra.mxu0 0.0
    %686 = vmatprep.subr.mxu0 0.0
    %687 = vmatpush1.msra.mxu0 0.0
    %688 = vmatprep.subr.mxu0 0.0
    %689 = vmatpush1.msra.mxu0 0.0
    %690 = vmatprep.subr.mxu0 0.0
    %691 = vmatpush1.msra.mxu0 0.0
    %692 = vmatprep.subr.mxu0 0.0
    %693 = vmatpush1.msra.mxu0 0.0
    %694 = vmatprep.subr.mxu0 0.0
    %695 = vmatpush1.msra.mxu0 0.0
    %696 = vmatprep.subr.mxu0 0.0
    %697 = vmatpush1.msra.mxu0 0.0
    %698 = vmatprep.mubr.f32.mxu0 0.0
    %699 = vmatmul.mubr.f32.gmra.mrb[0].mxu0 %v158
    %v700 = vpop.f32.mrb[0].mxu0
    %v701 = vadd.f32 1e-05, %v700
    %v702 = vpop.f32.mrb[0].mxu0
    %703 = vdwg.mxu0
    %v704 = vrsqrt.pop %v701
    %705 = vrot.lane.b32.xlu0 %v53, 124
    %v706 = vpop.permute.xlu0 %705
    %v708 = vmul.f32 %v704, %v706
    %710 = vset.pattern.permute.xlu0 0
    %711 = vperm.xlu0 %710, %v708
    %v712 = vpop.permute.xlu0 %711
    %v714 = vmul.f32 %v627, %v712
    %v715 = vmul.f32 %v628, %v712
    %716 = vset.pattern.permute.xlu0 5
    %717 = vperm.xlu0 %716, %v53
    %v718 = vpop.permute.xlu0 %717
    %v720 = vadd.f32 %v714, %v718
    %v721 = vadd.f32 %v715, %v718
    %v722 = vmax.f32 %v720, 0.0
    %v723 = vmax.f32 %v721, 0.0
    %725 = vset.pattern.permute.xlu0 0
    %726 = vperm.xlu0 %725, %v54
    %v727 = vpop.permute.xlu0 %726
    %730 = vset.pattern.permute.xlu0 0
    %731 = vperm.xlu0 %730, %v55
    %v732 = vpop.permute.xlu0 %731
    %735 = vset.pattern.permute.xlu0 0
    %736 = vperm.xlu0 %735, %v56
    %v737 = vpop.permute.xlu0 %736
    %740 = vset.pattern.permute.xlu0 0
    %741 = vperm.xlu0 %740, %v57
    %v742 = vpop.permute.xlu0 %741
    %v745 = vsel %vm156, %v49, 0
    %v748 = vsel %vm156, %v50, 0
    %v751 = vsel %vm156, %v51, 0
    %v754 = vsel %vm156, %v52, 0
    %756 = vmatprep.subr.mxu0 %v723
    %757 = vmatpush1.msra.mxu0 %v722
    %758 = vmatprep.subr.mxu0 0.0
    %759 = vmatpush1.msra.mxu0 0.0
    %760 = vmatprep.subr.mxu0 0.0
    %761 = vmatpush1.msra.mxu0 0.0
    %762 = vmatprep.subr.mxu0 0.0
    %763 = vmatpush1.msra.mxu0 0.0
    %764 = vmatprep.subr.mxu0 0.0
    %765 = vmatpush1.msra.mxu0 0.0
    %766 = vmatprep.subr.mxu0 0.0
    %767 = vmatpush1.msra.mxu0 0.0
    %768 = vmatprep.subr.mxu0 0.0
    %769 = vmatpush1.msra.mxu0 0.0
    %770 = vmatprep.subr.mxu0 0.0
    %771 = vmatpush1.msra.mxu0 0.0
    %772 = vmatprep.subr.mxu0 0.0
    %773 = vmatpush1.msra.mxu0 0.0
    %774 = vmatprep.subr.mxu0 0.0
    %775 = vmatpush1.msra.mxu0 0.0
    %776 = vmatprep.subr.mxu0 0.0
    %777 = vmatpush1.msra.mxu0 0.0
    %778 = vmatprep.subr.mxu0 0.0
    %779 = vmatpush1.msra.mxu0 0.0
    %780 = vmatprep.subr.mxu0 0.0
    %781 = vmatpush1.msra.mxu0 0.0
    %782 = vmatprep.subr.mxu0 0.0
    %783 = vmatpush1.msra.mxu0 0.0
    %784 = vmatprep.subr.mxu0 0.0
    %785 = vmatpush1.msra.mxu0 0.0
    %786 = vmatprep.subr.mxu0 0.0
    %787 = vmatpush1.msra.mxu0 0.0
    %788 = vmatprep.subr.mxu0 0.0
    %789 = vmatpush1.msra.mxu0 0.0
    %790 = vmatprep.subr.mxu0 0.0
    %791 = vmatpush1.msra.mxu0 0.0
    %792 = vmatprep.subr.mxu0 0.0
    %793 = vmatpush1.msra.mxu0 0.0
    %794 = vmatprep.subr.mxu0 0.0
    %795 = vmatpush1.msra.mxu0 0.0
    %796 = vmatprep.subr.mxu0 0.0
    %797 = vmatpush1.msra.mxu0 0.0
    %798 = vmatprep.subr.mxu0 0.0
    %799 = vmatpush1.msra.mxu0 0.0
    %800 = vmatprep.subr.mxu0 0.0
    %801 = vmatpush1.msra.mxu0 0.0
    %802 = vmatprep.subr.mxu0 0.0
    %803 = vmatpush1.msra.mxu0 0.0
    %804 = vmatprep.subr.mxu0 0.0
    %805 = vmatpush1.msra.mxu0 0.0
    %806 = vmatprep.subr.mxu0 0.0
    %807 = vmatpush1.msra.mxu0 0.0
    %808 = vmatprep.subr.mxu0 0.0
    %809 = vmatpush1.msra.mxu0 0.0
    %810 = vmatprep.subr.mxu0 0.0
    %811 = vmatpush1.msra.mxu0 0.0
    %812 = vmatprep.subr.mxu0 0.0
    %813 = vmatpush1.msra.mxu0 0.0
    %814 = vmatprep.subr.mxu0 0.0
    %815 = vmatpush1.msra.mxu0 0.0
    %816 = vmatprep.subr.mxu0 0.0
    %817 = vmatpush1.msra.mxu0 0.0
    %818 = vmatprep.subr.mxu0 0.0
    %819 = vmatpush1.msra.mxu0 0.0
    %820 = vmatprep.mubr.f32.mxu0 0.0
    %821 = vmatmul.mubr.f32.gmra.mrb[0].mxu0 %v745
    %v822 = vpop.f32.mrb[0].mxu0
    %v823 = vadd.f32 %v727, %v822
    %v824 = vpop.f32.mrb[0].mxu0
    %v825 = vadd.f32 %v727, %v824
    %826 = vmatprep.mubr.f32.mxu0 0.0
    %827 = vmatmul.mubr.f32.gmra.mrb[0].mxu0 %v748
    %v828 = vpop.f32.mrb[0].mxu0
    %v829 = vadd.f32 %v732, %v828
    %v830 = vpop.f32.mrb[0].mxu0
    %v831 = vadd.f32 %v732, %v830
    %832 = vmatprep.mubr.f32.mxu0 0.0
    %833 = vmatmul.mubr.f32.gmra.mrb[0].mxu0 %v751
    %v834 = vpop.f32.mrb[0].mxu0
    %v835 = vadd.f32 %v737, %v834
    %v836 = vpop.f32.mrb[0].mxu0
    %v837 = vadd.f32 %v737, %v836
    %838 = vmatprep.mubr.f32.mxu0 0.0
    %839 = vmatmul.mubr.f32.gmra.mrb[0].mxu0 %v754
    %v840 = vpop.f32.mrb[0].mxu0
    %v841 = vadd.f32 %v742, %v840
    %v842 = vpop.f32.mrb[0].mxu0
    %v843 = vadd.f32 %v742, %v842
    %844 = vdwg.mxu0
    %v845 = vadd.f32 %v823, %v825
    %846 = vadd.xlane.f32.xlu0 %v845
    %v847 = vpop.xlane.xlu0 %846
    %v848 = vadd.f32 %v829, %v831
    %849 = vadd.xlane.f32.xlu0 %v848
    %v850 = vpop.xlane.xlu0 %849
    %v851 = vadd.f32 %v835, %v837
    %852 = vadd.xlane.f32.xlu0 %v851
    %v853 = vpop.xlane.xlu0 %852
    %v854 = vadd.f32 %v841, %v843
    %855 = vadd.xlane.f32.xlu0 %v854
    %v856 = vpop.xlane.xlu0 %855
    %v858 = vsel %vm78, %v59, 0
    %v861 = vsel %vm78, %v60, 0
    %v864 = vsel %vm78, %v61, 0
    %v867 = vsel %vm78, %v62, 0
    %869 = vmatprep.subr.mxu0 0.0
    %870 = vmatpush1.msra.mxu0 %v847
    %871 = vmatprep.subr.mxu0 0.0
    %872 = vmatpush1.msra.mxu0 %v850
    %873 = vmatprep.subr.mxu0 0.0
    %874 = vmatpush1.msra.mxu0 %v853
    %875 = vmatprep.subr.mxu0 0.0
    %876 = vmatpush1.msra.mxu0 %v856
    %877 = vmatprep.subr.mxu0 0.0
    %878 = vmatpush1.msra.mxu0 0.0
    %879 = vmatprep.subr.mxu0 0.0
    %880 = vmatpush1.msra.mxu0 0.0
    %881 = vmatprep.subr.mxu0 0.0
    %882 = vmatpush1.msra.mxu0 0.0
    %883 = vmatprep.subr.mxu0 0.0
    %884 = vmatpush1.msra.mxu0 0.0
    %885 = vmatprep.subr.mxu0 0.0
    %886 = vmatpush1.msra.mxu0 0.0
    %887 = vmatprep.subr.mxu0 0.0
    %888 = vmatpush1.msra.mxu0 0.0
    %889 = vmatprep.subr.mxu0 0.0
    %890 = vmatpush1.msra.mxu0 0.0
    %891 = vmatprep.subr.mxu0 0.0
    %892 = vmatpush1.msra.mxu0 0.0
    %893 = vmatprep.subr.mxu0 0.0
    %894 = vmatpush1.msra.mxu0 0.0
    %895 = vmatprep.subr.mxu0 0.0
    %896 = vmatpush1.msra.mxu0 0.0
    %897 = vmatprep.subr.mxu0 0.0
    %898 = vmatpush1.msra.mxu0 0.0
    %899 = vmatprep.subr.mxu0 0.0
    %900 = vmatpush1.msra.mxu0 0.0
    %901 = vmatprep.subr.mxu0 0.0
    %902 = vmatpush1.msra.mxu0 0.0
    %903 = vmatprep.subr.mxu0 0.0
    %904 = vmatpush1.msra.mxu0 0.0
    %905 = vmatprep.subr.mxu0 0.0
    %906 = vmatpush1.msra.mxu0 0.0
    %907 = vmatprep.subr.mxu0 0.0
    %908 = vmatpush1.msra.mxu0 0.0
    %909 = vmatprep.subr.mxu0 0.0
    %910 = vmatpush1.msra.mxu0 0.0
    %911 = vmatprep.subr.mxu0 0.0
    %912 = vmatpush1.msra.mxu0 0.0
    %913 = vmatprep.subr.mxu0 0.0
    %914 = vmatpush1.msra.mxu0 0.0
    %915 = vmatprep.subr.mxu0 0.0
    %916 = vmatpush1.msra.mxu0 0.0
    %917 = vmatprep.subr.mxu0 0.0
    %918 = vmatpush1.msra.mxu0 0.0
    %919 = vmatprep.subr.mxu0 0.0
    %920 = vmatpush1.msra.mxu0 0.0
    %921 = vmatprep.subr.mxu0 0.0
    %922 = vmatpush1.msra.mxu0 0.0
    %923 = vmatprep.subr.mxu0 0.0
    %924 = vmatpush1.msra.mxu0 0.0
    %925 = vmatprep.subr.mxu0 0.0
    %926 = vmatpush1.msra.mxu0 0.0
    %927 = vmatprep.subr.mxu0 0.0
    %928 = vmatpush1.msra.mxu0 0.0
    %929 = vmatprep.subr.mxu0 0.0
    %930 = vmatpush1.msra.mxu0 0.0
    %931 = vmatprep.subr.mxu0 0.0
    %932 = vmatpush1.msra.mxu0 0.0
    %933 = vmatprep.mubr.f32.mxu0 0.0
    %934 = vmatmul.mubr.f32.gmra.mrb[0].mxu0 %v858
    %v935 = vpop.f32.mrb[0].mxu0
    %v936 = vadd.f32 0.0, %v935
    %v937 = vpop.f32.mrb[0].mxu0
    %938 = vmatprep.mubr.f32.mxu0 0.0
    %939 = vmatmul.mubr.f32.gmra.mrb[0].mxu0 %v861
    %v940 = vpop.f32.mrb[0].mxu0
    %v941 = vadd.f32 0.0, %v940
    %v942 = vpop.f32.mrb[0].mxu0
    %943 = vmatprep.mubr.f32.mxu0 0.0
    %944 = vmatmul.mubr.f32.gmra.mrb[0].mxu0 %v864
    %v945 = vpop.f32.mrb[0].mxu0
    %v946 = vadd.f32 0.0, %v945
    %v947 = vpop.f32.mrb[0].mxu0
    %948 = vmatprep.mubr.f32.mxu0 0.0
    %949 = vmatmul.mubr.f32.gmra.mrb[0].mxu0 %v867
    %v950 = vpop.f32.mrb[0].mxu0
    %v951 = vadd.f32 0.0, %v950
    %v952 = vpop.f32.mrb[0].mxu0
    %953 = vdwg.mxu0
    %955 = vset.pattern.permute.xlu0 0
    %956 = vperm.xlu0 %955, %v936
    %v957 = vpop.permute.xlu0 %956
    %960 = vset.pattern.permute.xlu0 0
    %961 = vperm.xlu0 %960, %v941
    %v962 = vpop.permute.xlu0 %961
    %965 = vset.pattern.permute.xlu0 0
    %966 = vperm.xlu0 %965, %v946
    %v967 = vpop.permute.xlu0 %966
    %970 = vset.pattern.permute.xlu0 0
    %971 = vperm.xlu0 %970, %v951
    %v972 = vpop.permute.xlu0 %971
    %v974 = vsub.f32 %v823, %v957
    %v975 = vsub.f32 %v825, %v957
    %v976 = vsub.f32 %v829, %v962
    %v977 = vsub.f32 %v831, %v962
    %v978 = vsub.f32 %v835, %v967
    %v979 = vsub.f32 %v837, %v967
    %v980 = vsub.f32 %v841, %v972
    %v981 = vsub.f32 %v843, %v972
    %v982 = vmul.f32 %v974, %v974
    %v983 = vmul.f32 %v975, %v975
    %v984 = vmul.f32 %v976, %v976
    %v985 = vmul.f32 %v977, %v977
    %v986 = vmul.f32 %v978, %v978
    %v987 = vmul.f32 %v979, %v979
    %v988 = vmul.f32 %v980, %v980
    %v989 = vmul.f32 %v981, %v981
    %v990 = vadd.f32 %v982, %v983
    %991 = vadd.xlane.f32.xlu0 %v990
    %v992 = vpop.xlane.xlu0 %991
    %v993 = vadd.f32 %v984, %v985
    %994 = vadd.xlane.f32.xlu0 %v993
    %v995 = vpop.xlane.xlu0 %994
    %v996 = vadd.f32 %v986, %v987
    %997 = vadd.xlane.f32.xlu0 %v996
    %v998 = vpop.xlane.xlu0 %997
    %v999 = vadd.f32 %v988, %v989
    %1000 = vadd.xlane.f32.xlu0 %v999
    %v1001 = vpop.xlane.xlu0 %1000
    %1002 = vmatprep.subr.mxu0 0.0
    %1003 = vmatpush1.msra.mxu0 %v992
    %1004 = vmatprep.subr.mxu0 0.0
    %1005 = vmatpush1.msra.mxu0 %v995
    %1006 = vmatprep.subr.mxu0 0.0
    %1007 = vmatpush1.msra.mxu0 %v998
    %1008 = vmatprep.subr.mxu0 0.0
    %1009 = vmatpush1.msra.mxu0 %v1001
    %1010 = vmatprep.subr.mxu0 0.0
    %1011 = vmatpush1.msra.mxu0 0.0
    %1012 = vmatprep.subr.mxu0 0.0
    %1013 = vmatpush1.msra.mxu0 0.0
    %1014 = vmatprep.subr.mxu0 0.0
    %1015 = vmatpush1.msra.mxu0 0.0
    %1016 = vmatprep.subr.mxu0 0.0
    %1017 = vmatpush1.msra.mxu0 0.0
    %1018 = vmatprep.subr.mxu0 0.0
    %1019 = vmatpush1.msra.mxu0 0.0
    %1020 = vmatprep.subr.mxu0 0.0
    %1021 = vmatpush1.msra.mxu0 0.0
    %1022 = vmatprep.subr.mxu0 0.0
    %1023 = vmatpush1.msra.mxu0 0.0
    %1024 = vmatprep.subr.mxu0 0.0
    %1025 = vmatpush1.msra.mxu0 0.0
    %1026 = vmatprep.subr.mxu0 0.0
    %1027 = vmatpush1.msra.mxu0 0.0
    %1028 = vmatprep.subr.mxu0 0.0
    %1029 = vmatpush1.msra.mxu0 0.0
    %1030 = vmatprep.subr.mxu0 0.0
    %1031 = vmatpush1.msra.mxu0 0.0
    %1032 = vmatprep.subr.mxu0 0.0
    %1033 = vmatpush1.msra.mxu0 0.0
    %1034 = vmatprep.subr.mxu0 0.0
    %1035 = vmatpush1.msra.mxu0 0.0
    %1036 = vmatprep.subr.mxu0 0.0
    %1037 = vmatpush1.msra.mxu0 0.0
    %1038 = vmatprep.subr.mxu0 0.0
    %1039 = vmatpush1.msra.mxu0 0.0
    %1040 = vmatprep.subr.mxu0 0.0
    %1041 = vmatpush1.msra.mxu0 0.0
    %1042 = vmatprep.subr.mxu0 0.0
    %1043 = vmatpush1.msra.mxu0 0.0
    %1044 = vmatprep.subr.mxu0 0.0
    %1045 = vmatpush1.msra.mxu0 0.0
    %1046 = vmatprep.subr.mxu0 0.0
    %1047 = vmatpush1.msra.mxu0 0.0
    %1048 = vmatprep.subr.mxu0 0.0
    %1049 = vmatpush1.msra.mxu0 0.0
    %1050 = vmatprep.subr.mxu0 0.0
    %1051 = vmatpush1.msra.mxu0 0.0
    %1052 = vmatprep.subr.mxu0 0.0
    %1053 = vmatpush1.msra.mxu0 0.0
    %1054 = vmatprep.subr.mxu0 0.0
    %1055 = vmatpush1.msra.mxu0 0.0
    %1056 = vmatprep.subr.mxu0 0.0
    %1057 = vmatpush1.msra.mxu0 0.0
    %1058 = vmatprep.subr.mxu0 0.0
    %1059 = vmatpush1.msra.mxu0 0.0
    %1060 = vmatprep.subr.mxu0 0.0
    %1061 = vmatpush1.msra.mxu0 0.0
    %1062 = vmatprep.subr.mxu0 0.0
    %1063 = vmatpush1.msra.mxu0 0.0
    %1064 = vmatprep.subr.mxu0 0.0
    %1065 = vmatpush1.msra.mxu0 0.0
    %1066 = vmatprep.mubr.f32.mxu0 0.0
    %1067 = vmatmul.mubr.f32.gmra.mrb[0].mxu0 %v858
    %v1068 = vpop.f32.mrb[0].mxu0
    %v1069 = vadd.f32 1e-05, %v1068
    %v1070 = vpop.f32.mrb[0].mxu0
    %1071 = vmatprep.mubr.f32.mxu0 0.0
    %1072 = vmatmul.mubr.f32.gmra.mrb[0].mxu0 %v861
    %v1073 = vpop.f32.mrb[0].mxu0
    %v1074 = vadd.f32 1e-05, %v1073
    %v1075 = vpop.f32.mrb[0].mxu0
    %1076 = vmatprep.mubr.f32.mxu0 0.0
    %1077 = vmatmul.mubr.f32.gmra.mrb[0].mxu0 %v864
    %v1078 = vpop.f32.mrb[0].mxu0
    %v1079 = vadd.f32 1e-05, %v1078
    %v1080 = vpop.f32.mrb[0].mxu0
    %1081 = vmatprep.mubr.f32.mxu0 0.0
    %1082 = vmatmul.mubr.f32.gmra.mrb[0].mxu0 %v867
    %v1083 = vpop.f32.mrb[0].mxu0
    %v1084 = vadd.f32 1e-05, %v1083
    %v1085 = vpop.f32.mrb[0].mxu0
    %1086 = vdwg.mxu0
    %v1087 = vrsqrt.pop %v1069
    %v1088 = vrsqrt.pop %v1074
    %v1089 = vrsqrt.pop %v1079
    %v1090 = vrsqrt.pop %v1084
    %1091 = vrot.lane.b32.xlu0 %v54, 127
    %v1092 = vpop.permute.xlu0 %1091
    %1093 = vrot.lane.b32.xlu0 %v55, 127
    %v1094 = vpop.permute.xlu0 %1093
    %1095 = vrot.lane.b32.xlu0 %v56, 127
    %v1096 = vpop.permute.xlu0 %1095
    %1097 = vrot.lane.b32.xlu0 %v57, 127
    %v1098 = vpop.permute.xlu0 %1097
    %v1103 = vmul.f32 %v1087, %v1092
    %v1104 = vmul.f32 %v1088, %v1094
    %v1105 = vmul.f32 %v1089, %v1096
    %v1106 = vmul.f32 %v1090, %v1098
    %1108 = vset.pattern.permute.xlu0 0
    %1109 = vperm.xlu0 %1108, %v1103
    %v1110 = vpop.permute.xlu0 %1109
    %1113 = vset.pattern.permute.xlu0 0
    %1114 = vperm.xlu0 %1113, %v1104
    %v1115 = vpop.permute.xlu0 %1114
    %1118 = vset.pattern.permute.xlu0 0
    %1119 = vperm.xlu0 %1118, %v1105
    %v1120 = vpop.permute.xlu0 %1119
    %1123 = vset.pattern.permute.xlu0 0
    %1124 = vperm.xlu0 %1123, %v1106
    %v1125 = vpop.permute.xlu0 %1124
    %v1127 = vmul.f32 %v974, %v1110
    %v1128 = vmul.f32 %v975, %v1110
    %v1129 = vmul.f32 %v976, %v1115
    %v1130 = vmul.f32 %v977, %v1115
    %v1131 = vmul.f32 %v978, %v1120
    %v1132 = vmul.f32 %v979, %v1120
    %v1133 = vmul.f32 %v980, %v1125
    %v1134 = vmul.f32 %v981, %v1125
    %1135 = vset.pattern.permute.xlu0 2
    %1136 = vperm.xlu0 %1135, %v54
    %v1137 = vpop.permute.xlu0 %1136
    %1139 = vset.pattern.permute.xlu0 2
    %1140 = vperm.xlu0 %1139, %v55
    %v1141 = vpop.permute.xlu0 %1140
    %1143 = vset.pattern.permute.xlu0 2
    %1144 = vperm.xlu0 %1143, %v56
    %v1145 = vpop.permute.xlu0 %1144
    %1147 = vset.pattern.permute.xlu0 2
    %1148 = vperm.xlu0 %1147, %v57
    %v1149 = vpop.permute.xlu0 %1148
    %v1151 = vadd.f32 %v1127, %v1137
    %v1152 = vadd.f32 %v1128, %v1137
    %v1153 = vadd.f32 %v1129, %v1141
    %v1154 = vadd.f32 %v1130, %v1141
    %v1155 = vadd.f32 %v1131, %v1145
    %v1156 = vadd.f32 %v1132, %v1145
    %v1157 = vadd.f32 %v1133, %v1149
    %v1158 = vadd.f32 %v1134, %v1149
    %v1159 = vmax.f32 %v1151, 0.0
    %v1160 = vmax.f32 %v1152, 0.0
    %v1161 = vmax.f32 %v1153, 0.0
    %v1162 = vmax.f32 %v1154, 0.0
    %v1163 = vmax.f32 %v1155, 0.0
    %v1164 = vmax.f32 %v1156, 0.0
    %v1165 = vmax.f32 %v1157, 0.0
    %v1166 = vmax.f32 %v1158, 0.0
    %v1167 = vadd.f32 %v65, %v1159
    %v1168 = vadd.f32 %v66, %v1160
    %v1169 = vadd.f32 %v67, %v1161
    %v1170 = vadd.f32 %v68, %v1162
    %v1171 = vadd.f32 %v69, %v1163
    %v1172 = vadd.f32 %v70, %v1164
    %v1173 = vadd.f32 %v71, %v1165
    %v1174 = vadd.f32 %v72, %v1166
    %v1175 = vmax.f32 %v1167, 0.0
    %v1176 = vmax.f32 %v1168, 0.0
    %v1177 = vmax.f32 %v1169, 0.0
    %v1178 = vmax.f32 %v1170, 0.0
    %v1179 = vmax.f32 %v1171, 0.0
    %v1180 = vmax.f32 %v1172, 0.0
    %v1181 = vmax.f32 %v1173, 0.0
    %v1182 = vmax.f32 %v1174, 0.0
    %1183 = vst [vmem:[#allocation5] sm:$0xff] %v1175
    %1184 = vst [vmem:[#allocation5 + $0x8] sm:$0xff] %v1176
    %1185 = vst [vmem:[#allocation5 + $0x10] sm:$0xff] %v1177
    %1186 = vst [vmem:[#allocation5 + $0x18] sm:$0xff] %v1178
    %1187 = vst [vmem:[#allocation5 + $0x20] sm:$0xff] %v1179
    %1188 = vst [vmem:[#allocation5 + $0x28] sm:$0xff] %v1180
    %1189 = vst [vmem:[#allocation5 + $0x30] sm:$0xff] %v1181
    %1190 = vst [vmem:[#allocation5 + $0x38] sm:$0xff] %v1182
    %s1191 = scalar_lea.vmem [#allocation2], 64
    %v1192 = vld [vmem:[%s1191] sm:$0xff]
    %v1193 = vld [vmem:[%s1191 + $0x8] sm:$0xff]
    %v1194 = vld [vmem:[%s1191 + $0x10] sm:$0xff]
    %v1195 = vld [vmem:[%s1191 + $0x18] sm:$0xff]
    %v1196 = vld [vmem:[%s1191 + $0x20] sm:$0xff]
    %v1197 = vld [vmem:[%s1191 + $0x28] sm:$0xff]
    %v1198 = vld [vmem:[%s1191 + $0x30] sm:$0xff]
    %v1199 = vld [vmem:[%s1191 + $0x38] sm:$0xff]
    %1200 = vmatprep.subr.mxu0 %v1193
    %1201 = vmatpush1.msra.mxu0 %v1192
    %1202 = vmatprep.subr.mxu0 %v1195
    %1203 = vmatpush1.msra.mxu0 %v1194
    %1204 = vmatprep.subr.mxu0 %v1197
    %1205 = vmatpush1.msra.mxu0 %v1196
    %1206 = vmatprep.subr.mxu0 %v1199
    %1207 = vmatpush1.msra.mxu0 %v1198
    %1208 = vmatprep.subr.mxu0 0.0
    %1209 = vmatpush1.msra.mxu0 0.0
    %1210 = vmatprep.subr.mxu0 0.0
    %1211 = vmatpush1.msra.mxu0 0.0
    %1212 = vmatprep.subr.mxu0 0.0
    %1213 = vmatpush1.msra.mxu0 0.0
    %1214 = vmatprep.subr.mxu0 0.0
    %1215 = vmatpush1.msra.mxu0 0.0
    %1216 = vmatprep.subr.mxu0 0.0
    %1217 = vmatpush1.msra.mxu0 0.0
    %1218 = vmatprep.subr.mxu0 0.0
    %1219 = vmatpush1.msra.mxu0 0.0
    %1220 = vmatprep.subr.mxu0 0.0
    %1221 = vmatpush1.msra.mxu0 0.0
    %1222 = vmatprep.subr.mxu0 0.0
    %1223 = vmatpush1.msra.mxu0 0.0
    %1224 = vmatprep.subr.mxu0 0.0
    %1225 = vmatpush1.msra.mxu0 0.0
    %1226 = vmatprep.subr.mxu0 0.0
    %1227 = vmatpush1.msra.mxu0 0.0
    %1228 = vmatprep.subr.mxu0 0.0
    %1229 = vmatpush1.msra.mxu0 0.0
    %1230 = vmatprep.subr.mxu0 0.0
    %1231 = vmatpush1.msra.mxu0 0.0
    %1232 = vmatprep.subr.mxu0 0.0
    %1233 = vmatpush1.msra.mxu0 0.0
    %1234 = vmatprep.subr.mxu0 0.0
    %1235 = vmatpush1.msra.mxu0 0.0
    %1236 = vmatprep.subr.mxu0 0.0
    %1237 = vmatpush1.msra.mxu0 0.0
    %1238 = vmatprep.subr.mxu0 0.0
    %1239 = vmatpush1.msra.mxu0 0.0
    %1240 = vmatprep.subr.mxu0 0.0
    %1241 = vmatpush1.msra.mxu0 0.0
    %1242 = vmatprep.subr.mxu0 0.0
    %1243 = vmatpush1.msra.mxu0 0.0
    %1244 = vmatprep.subr.mxu0 0.0
    %1245 = vmatpush1.msra.mxu0 0.0
    %1246 = vmatprep.subr.mxu0 0.0
    %1247 = vmatpush1.msra.mxu0 0.0
    %1248 = vmatprep.subr.mxu0 0.0
    %1249 = vmatpush1.msra.mxu0 0.0
    %1250 = vmatprep.subr.mxu0 0.0
    %1251 = vmatpush1.msra.mxu0 0.0
    %1252 = vmatprep.subr.mxu0 0.0
    %1253 = vmatpush1.msra.mxu0 0.0
    %1254 = vmatprep.subr.mxu0 0.0
    %1255 = vmatpush1.msra.mxu0 0.0
    %1256 = vmatprep.subr.mxu0 0.0
    %1257 = vmatpush1.msra.mxu0 0.0
    %1258 = vmatprep.subr.mxu0 0.0
    %1259 = vmatpush1.msra.mxu0 0.0
    %1260 = vmatprep.subr.mxu0 0.0
    %1261 = vmatpush1.msra.mxu0 0.0
    %1262 = vmatprep.subr.mxu0 0.0
    %1263 = vmatpush1.msra.mxu0 0.0
    %1264 = vmatprep.mubr.f32.mxu0 0.0
    %1265 = vmatmul.mubr.f32.gmra.mrb[0].mxu0 %v80
    %v1266 = vpop.f32.mrb[0].mxu0
    %v1267 = vadd.f32 %v76, %v1266
    %v1268 = vpop.f32.mrb[0].mxu0
    %v1269 = vadd.f32 %v76, %v1268
    %1270 = vdwg.mxu0
    %v1271 = vadd.f32 %v1267, %v1269
    %1272 = vadd.xlane.f32.xlu0 %v1271
    %v1273 = vpop.xlane.xlu0 %1272
    %1274 = vmatprep.subr.mxu0 0.0
    %1275 = vmatpush1.msra.mxu0 %v1273
    %1276 = vmatprep.subr.mxu0 0.0
    %1277 = vmatpush1.msra.mxu0 0.0
    %1278 = vmatprep.subr.mxu0 0.0
    %1279 = vmatpush1.msra.mxu0 0.0
    %1280 = vmatprep.subr.mxu0 0.0
    %1281 = vmatpush1.msra.mxu0 0.0
    %1282 = vmatprep.subr.mxu0 0.0
    %1283 = vmatpush1.msra.mxu0 0.0
    %1284 = vmatprep.subr.mxu0 0.0
    %1285 = vmatpush1.msra.mxu0 0.0
    %1286 = vmatprep.subr.mxu0 0.0
    %1287 = vmatpush1.msra.mxu0 0.0
    %1288 = vmatprep.subr.mxu0 0.0
    %1289 = vmatpush1.msra.mxu0 0.0
    %1290 = vmatprep.subr.mxu0 0.0
    %1291 = vmatpush1.msra.mxu0 0.0
    %1292 = vmatprep.subr.mxu0 0.0
    %1293 = vmatpush1.msra.mxu0 0.0
    %1294 = vmatprep.subr.mxu0 0.0
    %1295 = vmatpush1.msra.mxu0 0.0
    %1296 = vmatprep.subr.mxu0 0.0
    %1297 = vmatpush1.msra.mxu0 0.0
    %1298 = vmatprep.subr.mxu0 0.0
    %1299 = vmatpush1.msra.mxu0 0.0
    %1300 = vmatprep.subr.mxu0 0.0
    %1301 = vmatpush1.msra.mxu0 0.0
    %1302 = vmatprep.subr.mxu0 0.0
    %1303 = vmatpush1.msra.mxu0 0.0
    %1304 = vmatprep.subr.mxu0 0.0
    %1305 = vmatpush1.msra.mxu0 0.0
    %1306 = vmatprep.subr.mxu0 0.0
    %1307 = vmatpush1.msra.mxu0 0.0
    %1308 = vmatprep.subr.mxu0 0.0
    %1309 = vmatpush1.msra.mxu0 0.0
    %1310 = vmatprep.subr.mxu0 0.0
    %1311 = vmatpush1.msra.mxu0 0.0
    %1312 = vmatprep.subr.mxu0 0.0
    %1313 = vmatpush1.msra.mxu0 0.0
    %1314 = vmatprep.subr.mxu0 0.0
    %1315 = vmatpush1.msra.mxu0 0.0
    %1316 = vmatprep.subr.mxu0 0.0
    %1317 = vmatpush1.msra.mxu0 0.0
    %1318 = vmatprep.subr.mxu0 0.0
    %1319 = vmatpush1.msra.mxu0 0.0
    %1320 = vmatprep.subr.mxu0 0.0
    %1321 = vmatpush1.msra.mxu0 0.0
    %1322 = vmatprep.subr.mxu0 0.0
    %1323 = vmatpush1.msra.mxu0 0.0
    %1324 = vmatprep.subr.mxu0 0.0
    %1325 = vmatpush1.msra.mxu0 0.0
    %1326 = vmatprep.subr.mxu0 0.0
    %1327 = vmatpush1.msra.mxu0 0.0
    %1328 = vmatprep.subr.mxu0 0.0
    %1329 = vmatpush1.msra.mxu0 0.0
    %1330 = vmatprep.subr.mxu0 0.0
    %1331 = vmatpush1.msra.mxu0 0.0
    %1332 = vmatprep.subr.mxu0 0.0
    %1333 = vmatpush1.msra.mxu0 0.0
    %1334 = vmatprep.subr.mxu0 0.0
    %1335 = vmatpush1.msra.mxu0 0.0
    %1336 = vmatprep.subr.mxu0 0.0
    %1337 = vmatpush1.msra.mxu0 0.0
    %1338 = vmatprep.mubr.f32.mxu0 0.0
    %1339 = vmatmul.mubr.f32.gmra.mrb[0].mxu0 %v158
    %v1340 = vpop.f32.mrb[0].mxu0
    %v1341 = vadd.f32 0.0, %v1340
    %v1342 = vpop.f32.mrb[0].mxu0
    %1343 = vdwg.mxu0
    %1345 = vset.pattern.permute.xlu0 0
    %1346 = vperm.xlu0 %1345, %v1341
    %v1347 = vpop.permute.xlu0 %1346
    %v1349 = vsub.f32 %v1267, %v1347
    %v1350 = vsub.f32 %v1269, %v1347
    %v1351 = vmul.f32 %v1349, %v1349
    %v1352 = vmul.f32 %v1350, %v1350
    %v1353 = vadd.f32 %v1351, %v1352
    %1354 = vadd.xlane.f32.xlu0 %v1353
    %v1355 = vpop.xlane.xlu0 %1354
    %1356 = vmatprep.subr.mxu0 0.0
    %1357 = vmatpush1.msra.mxu0 %v1355
    %1358 = vmatprep.subr.mxu0 0.0
    %1359 = vmatpush1.msra.mxu0 0.0
    %1360 = vmatprep.subr.mxu0 0.0
    %1361 = vmatpush1.msra.mxu0 0.0
    %1362 = vmatprep.subr.mxu0 0.0
    %1363 = vmatpush1.msra.mxu0 0.0
    %1364 = vmatprep.subr.mxu0 0.0
    %1365 = vmatpush1.msra.mxu0 0.0
    %1366 = vmatprep.subr.mxu0 0.0
    %1367 = vmatpush1.msra.mxu0 0.0
    %1368 = vmatprep.subr.mxu0 0.0
    %1369 = vmatpush1.msra.mxu0 0.0
    %1370 = vmatprep.subr.mxu0 0.0
    %1371 = vmatpush1.msra.mxu0 0.0
    %1372 = vmatprep.subr.mxu0 0.0
    %1373 = vmatpush1.msra.mxu0 0.0
    %1374 = vmatprep.subr.mxu0 0.0
    %1375 = vmatpush1.msra.mxu0 0.0
    %1376 = vmatprep.subr.mxu0 0.0
    %1377 = vmatpush1.msra.mxu0 0.0
    %1378 = vmatprep.subr.mxu0 0.0
    %1379 = vmatpush1.msra.mxu0 0.0
    %1380 = vmatprep.subr.mxu0 0.0
    %1381 = vmatpush1.msra.mxu0 0.0
    %1382 = vmatprep.subr.mxu0 0.0
    %1383 = vmatpush1.msra.mxu0 0.0
    %1384 = vmatprep.subr.mxu0 0.0
    %1385 = vmatpush1.msra.mxu0 0.0
    %1386 = vmatprep.subr.mxu0 0.0
    %1387 = vmatpush1.msra.mxu0 0.0
    %1388 = vmatprep.subr.mxu0 0.0
    %1389 = vmatpush1.msra.mxu0 0.0
    %1390 = vmatprep.subr.mxu0 0.0
    %1391 = vmatpush1.msra.mxu0 0.0
    %1392 = vmatprep.subr.mxu0 0.0
    %1393 = vmatpush1.msra.mxu0 0.0
    %1394 = vmatprep.subr.mxu0 0.0
    %1395 = vmatpush1.msra.mxu0 0.0
    %1396 = vmatprep.subr.mxu0 0.0
    %1397 = vmatpush1.msra.mxu0 0.0
    %1398 = vmatprep.subr.mxu0 0.0
    %1399 = vmatpush1.msra.mxu0 0.0
    %1400 = vmatprep.subr.mxu0 0.0
    %1401 = vmatpush1.msra.mxu0 0.0
    %1402 = vmatprep.subr.mxu0 0.0
    %1403 = vmatpush1.msra.mxu0 0.0
    %1404 = vmatprep.subr.mxu0 0.0
    %1405 = vmatpush1.msra.mxu0 0.0
    %1406 = vmatprep.subr.mxu0 0.0
    %1407 = vmatpush1.msra.mxu0 0.0
    %1408 = vmatprep.subr.mxu0 0.0
    %1409 = vmatpush1.msra.mxu0 0.0
    %1410 = vmatprep.subr.mxu0 0.0
    %1411 = vmatpush1.msra.mxu0 0.0
    %1412 = vmatprep.subr.mxu0 0.0
    %1413 = vmatpush1.msra.mxu0 0.0
    %1414 = vmatprep.subr.mxu0 0.0
    %1415 = vmatpush1.msra.mxu0 0.0
    %1416 = vmatprep.subr.mxu0 0.0
    %1417 = vmatpush1.msra.mxu0 0.0
    %1418 = vmatprep.subr.mxu0 0.0
    %1419 = vmatpush1.msra.mxu0 0.0
    %1420 = vmatprep.mubr.f32.mxu0 0.0
    %1421 = vmatmul.mubr.f32.gmra.mrb[0].mxu0 %v158
    %v1422 = vpop.f32.mrb[0].mxu0
    %v1423 = vadd.f32 1e-05, %v1422
    %v1424 = vpop.f32.mrb[0].mxu0
    %1425 = vdwg.mxu0
    %v1426 = vrsqrt.pop %v1423
    %v1427 = vmul.f32 %v1426, %v314
    %1429 = vset.pattern.permute.xlu0 0
    %1430 = vperm.xlu0 %1429, %v1427
    %v1431 = vpop.permute.xlu0 %1430
    %v1433 = vmul.f32 %v1349, %v1431
    %v1434 = vmul.f32 %v1350, %v1431
    %v1435 = vadd.f32 %v1433, %v326
    %v1436 = vadd.f32 %v1434, %v326
    %v1437 = vmax.f32 %v1435, 0.0
    %v1438 = vmax.f32 %v1436, 0.0
    %1439 = vrot.lane.b32.xlu0 %v1437, 17
    %v1440 = vpop.permute.xlu0 %1439
    %1441 = vrot.lane.b32.xlu0 %v1438, 17
    %v1442 = vpop.permute.xlu0 %1441
    %v1443 = vsel %vm338, %v1440, %v1442
    %v1444 = vsel %vm338, %v1442, %v1440
    %v1445 = vmul.f32 %v1444, %v344
    %v1446 = vmul.f32 %v1443, %v348
    %1447 = vrot.lane.b32.xlu0 %v1437, 16
    %v1448 = vpop.permute.xlu0 %1447
    %1449 = vrot.lane.b32.xlu0 %v1438, 16
    %v1450 = vpop.permute.xlu0 %1449
    %v1451 = vsel %vm355, %v1448, %v1450
    %v1452 = vsel %vm355, %v1450, %v1448
    %v1453 = vmul.f32 %v1452, %v361
    %v1454 = vmul.f32 %v1451, %v365
    %1455 = vrot.lane.b32.xlu0 %v1437, 15
    %v1456 = vpop.permute.xlu0 %1455
    %1457 = vrot.lane.b32.xlu0 %v1438, 15
    %v1458 = vpop.permute.xlu0 %1457
    %v1459 = vsel %vm372, %v1456, %v1458
    %v1460 = vsel %vm372, %v1458, %v1456
    %v1461 = vmul.f32 %v1460, %v378
    %v1462 = vmul.f32 %v1459, %v382
    %1463 = vrot.lane.b32.xlu0 %v1437, 1
    %v1464 = vpop.permute.xlu0 %1463
    %1465 = vrot.lane.b32.xlu0 %v1438, 1
    %v1466 = vpop.permute.xlu0 %1465
    %v1467 = vsel %vm389, %v1464, %v1466
    %v1468 = vsel %vm389, %v1466, %v1464
    %v1469 = vmul.f32 %v1468, %v395
    %v1470 = vmul.f32 %v1467, %v399
    %1471 = vrot.lane.b32.xlu0 %v1437, 127
    %v1472 = vpop.permute.xlu0 %1471
    %1473 = vrot.lane.b32.xlu0 %v1438, 127
    %v1474 = vpop.permute.xlu0 %1473
    %v1475 = vsel %vm406, %v1472, %v1474
    %v1476 = vsel %vm406, %v1474, %v1472
    %v1477 = vmul.f32 %v1475, %v412
    %v1478 = vmul.f32 %v1476, %v416
    %1479 = vrot.lane.b32.xlu0 %v1437, 113
    %v1480 = vpop.permute.xlu0 %1479
    %1481 = vrot.lane.b32.xlu0 %v1438, 113
    %v1482 = vpop.permute.xlu0 %1481
    %v1483 = vsel %vm423, %v1480, %v1482
    %v1484 = vsel %vm423, %v1482, %v1480
    %v1485 = vmul.f32 %v1483, %v429
    %v1486 = vmul.f32 %v1484, %v433
    %1487 = vrot.lane.b32.xlu0 %v1437, 112
    %v1488 = vpop.permute.xlu0 %1487
    %1489 = vrot.lane.b32.xlu0 %v1438, 112
    %v1490 = vpop.permute.xlu0 %1489
    %v1491 = vsel %vm440, %v1488, %v1490
    %v1492 = vsel %vm440, %v1490, %v1488
    %v1493 = vmul.f32 %v1491, %v446
    %v1494 = vmul.f32 %v1492, %v450
    %1495 = vrot.lane.b32.xlu0 %v1437, 111
    %v1496 = vpop.permute.xlu0 %1495
    %1497 = vrot.lane.b32.xlu0 %v1438, 111
    %v1498 = vpop.permute.xlu0 %1497
    %v1499 = vsel %vm457, %v1496, %v1498
    %v1500 = vsel %vm457, %v1498, %v1496
    %v1501 = vmul.f32 %v1499, %v463
    %v1502 = vmul.f32 %v1500, %v467
    %1503 = vmatprep.subr.mxu0 %v1446
    %1504 = vmatpush1.msra.mxu0 %v1445
    %1505 = vmatprep.subr.mxu0 %v1454
    %1506 = vmatpush1.msra.mxu0 %v1453
    %1507 = vmatprep.subr.mxu0 %v1462
    %1508 = vmatpush1.msra.mxu0 %v1461
    %1509 = vmatprep.subr.mxu0 %v1470
    %1510 = vmatpush1.msra.mxu0 %v1469
    %1511 = vmatprep.subr.mxu0 %v1438
    %1512 = vmatpush1.msra.mxu0 %v1437
    %1513 = vmatprep.subr.mxu0 %v1478
    %1514 = vmatpush1.msra.mxu0 %v1477
    %1515 = vmatprep.subr.mxu0 %v1486
    %1516 = vmatpush1.msra.mxu0 %v1485
    %1517 = vmatprep.subr.mxu0 %v1494
    %1518 = vmatpush1.msra.mxu0 %v1493
    %1519 = vmatprep.subr.mxu0 %v1502
    %1520 = vmatpush1.msra.mxu0 %v1501
    %1521 = vmatprep.subr.mxu0 0.0
    %1522 = vmatpush1.msra.mxu0 0.0
    %1523 = vmatprep.subr.mxu0 0.0
    %1524 = vmatpush1.msra.mxu0 0.0
    %1525 = vmatprep.subr.mxu0 0.0
    %1526 = vmatpush1.msra.mxu0 0.0
    %1527 = vmatprep.subr.mxu0 0.0
    %1528 = vmatpush1.msra.mxu0 0.0
    %1529 = vmatprep.subr.mxu0 0.0
    %1530 = vmatpush1.msra.mxu0 0.0
    %1531 = vmatprep.subr.mxu0 0.0
    %1532 = vmatpush1.msra.mxu0 0.0
    %1533 = vmatprep.subr.mxu0 0.0
    %1534 = vmatpush1.msra.mxu0 0.0
    %1535 = vmatprep.subr.mxu0 0.0
    %1536 = vmatpush1.msra.mxu0 0.0
    %1537 = vmatprep.subr.mxu0 0.0
    %1538 = vmatpush1.msra.mxu0 0.0
    %1539 = vmatprep.subr.mxu0 0.0
    %1540 = vmatpush1.msra.mxu0 0.0
    %1541 = vmatprep.subr.mxu0 0.0
    %1542 = vmatpush1.msra.mxu0 0.0
    %1543 = vmatprep.subr.mxu0 0.0
    %1544 = vmatpush1.msra.mxu0 0.0
    %1545 = vmatprep.subr.mxu0 0.0
    %1546 = vmatpush1.msra.mxu0 0.0
    %1547 = vmatprep.subr.mxu0 0.0
    %1548 = vmatpush1.msra.mxu0 0.0
    %1549 = vmatprep.subr.mxu0 0.0
    %1550 = vmatpush1.msra.mxu0 0.0
    %1551 = vmatprep.subr.mxu0 0.0
    %1552 = vmatpush1.msra.mxu0 0.0
    %1553 = vmatprep.subr.mxu0 0.0
    %1554 = vmatpush1.msra.mxu0 0.0
    %1555 = vmatprep.subr.mxu0 0.0
    %1556 = vmatpush1.msra.mxu0 0.0
    %1557 = vmatprep.subr.mxu0 0.0
    %1558 = vmatpush1.msra.mxu0 0.0
    %1559 = vmatprep.subr.mxu0 0.0
    %1560 = vmatpush1.msra.mxu0 0.0
    %1561 = vmatprep.subr.mxu0 0.0
    %1562 = vmatpush1.msra.mxu0 0.0
    %1563 = vmatprep.subr.mxu0 0.0
    %1564 = vmatpush1.msra.mxu0 0.0
    %1565 = vmatprep.subr.mxu0 0.0
    %1566 = vmatpush1.msra.mxu0 0.0
    %1567 = vmatprep.mubr.f32.mxu0 0.0
    %1568 = vmatmul.mubr.f32.gmra.mrb[0].mxu0 %v476
    %v1569 = vpop.f32.mrb[0].mxu0
    %v1570 = vadd.f32 %v472, %v1569
    %v1571 = vpop.f32.mrb[0].mxu0
    %v1572 = vadd.f32 %v472, %v1571
    %1573 = vdwg.mxu0
    %v1574 = vadd.f32 %v1570, %v1572
    %1575 = vadd.xlane.f32.xlu0 %v1574
    %v1576 = vpop.xlane.xlu0 %1575
    %1577 = vmatprep.subr.mxu0 0.0
    %1578 = vmatpush1.msra.mxu0 %v1576
    %1579 = vmatprep.subr.mxu0 0.0
    %1580 = vmatpush1.msra.mxu0 0.0
    %1581 = vmatprep.subr.mxu0 0.0
    %1582 = vmatpush1.msra.mxu0 0.0
    %1583 = vmatprep.subr.mxu0 0.0
    %1584 = vmatpush1.msra.mxu0 0.0
    %1585 = vmatprep.subr.mxu0 0.0
    %1586 = vmatpush1.msra.mxu0 0.0
    %1587 = vmatprep.subr.mxu0 0.0
    %1588 = vmatpush1.msra.mxu0 0.0
    %1589 = vmatprep.subr.mxu0 0.0
    %1590 = vmatpush1.msra.mxu0 0.0
    %1591 = vmatprep.subr.mxu0 0.0
    %1592 = vmatpush1.msra.mxu0 0.0
    %1593 = vmatprep.subr.mxu0 0.0
    %1594 = vmatpush1.msra.mxu0 0.0
    %1595 = vmatprep.subr.mxu0 0.0
    %1596 = vmatpush1.msra.mxu0 0.0
    %1597 = vmatprep.subr.mxu0 0.0
    %1598 = vmatpush1.msra.mxu0 0.0
    %1599 = vmatprep.subr.mxu0 0.0
    %1600 = vmatpush1.msra.mxu0 0.0
    %1601 = vmatprep.subr.mxu0 0.0
    %1602 = vmatpush1.msra.mxu0 0.0
    %1603 = vmatprep.subr.mxu0 0.0
    %1604 = vmatpush1.msra.mxu0 0.0
    %1605 = vmatprep.subr.mxu0 0.0
    %1606 = vmatpush1.msra.mxu0 0.0
    %1607 = vmatprep.subr.mxu0 0.0
    %1608 = vmatpush1.msra.mxu0 0.0
    %1609 = vmatprep.subr.mxu0 0.0
    %1610 = vmatpush1.msra.mxu0 0.0
    %1611 = vmatprep.subr.mxu0 0.0
    %1612 = vmatpush1.msra.mxu0 0.0
    %1613 = vmatprep.subr.mxu0 0.0
    %1614 = vmatpush1.msra.mxu0 0.0
    %1615 = vmatprep.subr.mxu0 0.0
    %1616 = vmatpush1.msra.mxu0 0.0
    %1617 = vmatprep.subr.mxu0 0.0
    %1618 = vmatpush1.msra.mxu0 0.0
    %1619 = vmatprep.subr.mxu0 0.0
    %1620 = vmatpush1.msra.mxu0 0.0
    %1621 = vmatprep.subr.mxu0 0.0
    %1622 = vmatpush1.msra.mxu0 0.0
    %1623 = vmatprep.subr.mxu0 0.0
    %1624 = vmatpush1.msra.mxu0 0.0
    %1625 = vmatprep.subr.mxu0 0.0
    %1626 = vmatpush1.msra.mxu0 0.0
    %1627 = vmatprep.subr.mxu0 0.0
    %1628 = vmatpush1.msra.mxu0 0.0
    %1629 = vmatprep.subr.mxu0 0.0
    %1630 = vmatpush1.msra.mxu0 0.0
    %1631 = vmatprep.subr.mxu0 0.0
    %1632 = vmatpush1.msra.mxu0 0.0
    %1633 = vmatprep.subr.mxu0 0.0
    %1634 = vmatpush1.msra.mxu0 0.0
    %1635 = vmatprep.subr.mxu0 0.0
    %1636 = vmatpush1.msra.mxu0 0.0
    %1637 = vmatprep.subr.mxu0 0.0
    %1638 = vmatpush1.msra.mxu0 0.0
    %1639 = vmatprep.subr.mxu0 0.0
    %1640 = vmatpush1.msra.mxu0 0.0
    %1641 = vmatprep.mubr.f32.mxu0 0.0
    %1642 = vmatmul.mubr.f32.gmra.mrb[0].mxu0 %v158
    %v1643 = vpop.f32.mrb[0].mxu0
    %v1644 = vadd.f32 0.0, %v1643
    %v1645 = vpop.f32.mrb[0].mxu0
    %1646 = vdwg.mxu0
    %1648 = vset.pattern.permute.xlu0 0
    %1649 = vperm.xlu0 %1648, %v1644
    %v1650 = vpop.permute.xlu0 %1649
    %v1652 = vsub.f32 %v1570, %v1650
    %v1653 = vsub.f32 %v1572, %v1650
    %v1654 = vmul.f32 %v1652, %v1652
    %v1655 = vmul.f32 %v1653, %v1653
    %v1656 = vadd.f32 %v1654, %v1655
    %1657 = vadd.xlane.f32.xlu0 %v1656
    %v1658 = vpop.xlane.xlu0 %1657
    %1659 = vmatprep.subr.mxu0 0.0
    %1660 = vmatpush1.msra.mxu0 %v1658
    %1661 = vmatprep.subr.mxu0 0.0
    %1662 = vmatpush1.msra.mxu0 0.0
    %1663 = vmatprep.subr.mxu0 0.0
    %1664 = vmatpush1.msra.mxu0 0.0
    %1665 = vmatprep.subr.mxu0 0.0
    %1666 = vmatpush1.msra.mxu0 0.0
    %1667 = vmatprep.subr.mxu0 0.0
    %1668 = vmatpush1.msra.mxu0 0.0
    %1669 = vmatprep.subr.mxu0 0.0
    %1670 = vmatpush1.msra.mxu0 0.0
    %1671 = vmatprep.subr.mxu0 0.0
    %1672 = vmatpush1.msra.mxu0 0.0
    %1673 = vmatprep.subr.mxu0 0.0
    %1674 = vmatpush1.msra.mxu0 0.0
    %1675 = vmatprep.subr.mxu0 0.0
    %1676 = vmatpush1.msra.mxu0 0.0
    %1677 = vmatprep.subr.mxu0 0.0
    %1678 = vmatpush1.msra.mxu0 0.0
    %1679 = vmatprep.subr.mxu0 0.0
    %1680 = vmatpush1.msra.mxu0 0.0
    %1681 = vmatprep.subr.mxu0 0.0
    %1682 = vmatpush1.msra.mxu0 0.0
    %1683 = vmatprep.subr.mxu0 0.0
    %1684 = vmatpush1.msra.mxu0 0.0
    %1685 = vmatprep.subr.mxu0 0.0
    %1686 = vmatpush1.msra.mxu0 0.0
    %1687 = vmatprep.subr.mxu0 0.0
    %1688 = vmatpush1.msra.mxu0 0.0
    %1689 = vmatprep.subr.mxu0 0.0
    %1690 = vmatpush1.msra.mxu0 0.0
    %1691 = vmatprep.subr.mxu0 0.0
    %1692 = vmatpush1.msra.mxu0 0.0
    %1693 = vmatprep.subr.mxu0 0.0
    %1694 = vmatpush1.msra.mxu0 0.0
    %1695 = vmatprep.subr.mxu0 0.0
    %1696 = vmatpush1.msra.mxu0 0.0
    %1697 = vmatprep.subr.mxu0 0.0
    %1698 = vmatpush1.msra.mxu0 0.0
    %1699 = vmatprep.subr.mxu0 0.0
    %1700 = vmatpush1.msra.mxu0 0.0
    %1701 = vmatprep.subr.mxu0 0.0
    %1702 = vmatpush1.msra.mxu0 0.0
    %1703 = vmatprep.subr.mxu0 0.0
    %1704 = vmatpush1.msra.mxu0 0.0
    %1705 = vmatprep.subr.mxu0 0.0
    %1706 = vmatpush1.msra.mxu0 0.0
    %1707 = vmatprep.subr.mxu0 0.0
    %1708 = vmatpush1.msra.mxu0 0.0
    %1709 = vmatprep.subr.mxu0 0.0
    %1710 = vmatpush1.msra.mxu0 0.0
    %1711 = vmatprep.subr.mxu0 0.0
    %1712 = vmatpush1.msra.mxu0 0.0
    %1713 = vmatprep.subr.mxu0 0.0
    %1714 = vmatpush1.msra.mxu0 0.0
    %1715 = vmatprep.subr.mxu0 0.0
    %1716 = vmatpush1.msra.mxu0 0.0
    %1717 = vmatprep.subr.mxu0 0.0
    %1718 = vmatpush1.msra.mxu0 0.0
    %1719 = vmatprep.subr.mxu0 0.0
    %1720 = vmatpush1.msra.mxu0 0.0
    %1721 = vmatprep.subr.mxu0 0.0
    %1722 = vmatpush1.msra.mxu0 0.0
    %1723 = vmatprep.mubr.f32.mxu0 0.0
    %1724 = vmatmul.mubr.f32.gmra.mrb[0].mxu0 %v158
    %v1725 = vpop.f32.mrb[0].mxu0
    %v1726 = vadd.f32 1e-05, %v1725
    %v1727 = vpop.f32.mrb[0].mxu0
    %1728 = vdwg.mxu0
    %v1729 = vrsqrt.pop %v1726
    %v1730 = vmul.f32 %v1729, %v706
    %1732 = vset.pattern.permute.xlu0 0
    %1733 = vperm.xlu0 %1732, %v1730
    %v1734 = vpop.permute.xlu0 %1733
    %v1736 = vmul.f32 %v1652, %v1734
    %v1737 = vmul.f32 %v1653, %v1734
    %v1738 = vadd.f32 %v1736, %v718
    %v1739 = vadd.f32 %v1737, %v718
    %v1740 = vmax.f32 %v1738, 0.0
    %v1741 = vmax.f32 %v1739, 0.0
    %1742 = vmatprep.subr.mxu0 %v1741
    %1743 = vmatpush1.msra.mxu0 %v1740
    %1744 = vmatprep.subr.mxu0 0.0
    %1745 = vmatpush1.msra.mxu0 0.0
    %1746 = vmatprep.subr.mxu0 0.0
    %1747 = vmatpush1.msra.mxu0 0.0
    %1748 = vmatprep.subr.mxu0 0.0
    %1749 = vmatpush1.msra.mxu0 0.0
    %1750 = vmatprep.subr.mxu0 0.0
    %1751 = vmatpush1.msra.mxu0 0.0
    %1752 = vmatprep.subr.mxu0 0.0
    %1753 = vmatpush1.msra.mxu0 0.0
    %1754 = vmatprep.subr.mxu0 0.0
    %1755 = vmatpush1.msra.mxu0 0.0
    %1756 = vmatprep.subr.mxu0 0.0
    %1757 = vmatpush1.msra.mxu0 0.0
    %1758 = vmatprep.subr.mxu0 0.0
    %1759 = vmatpush1.msra.mxu0 0.0
    %1760 = vmatprep.subr.mxu0 0.0
    %1761 = vmatpush1.msra.mxu0 0.0
    %1762 = vmatprep.subr.mxu0 0.0
    %1763 = vmatpush1.msra.mxu0 0.0
    %1764 = vmatprep.subr.mxu0 0.0
    %1765 = vmatpush1.msra.mxu0 0.0
    %1766 = vmatprep.subr.mxu0 0.0
    %1767 = vmatpush1.msra.mxu0 0.0
    %1768 = vmatprep.subr.mxu0 0.0
    %1769 = vmatpush1.msra.mxu0 0.0
    %1770 = vmatprep.subr.mxu0 0.0
    %1771 = vmatpush1.msra.mxu0 0.0
    %1772 = vmatprep.subr.mxu0 0.0
    %1773 = vmatpush1.msra.mxu0 0.0
    %1774 = vmatprep.subr.mxu0 0.0
    %1775 = vmatpush1.msra.mxu0 0.0
    %1776 = vmatprep.subr.mxu0 0.0
    %1777 = vmatpush1.msra.mxu0 0.0
    %1778 = vmatprep.subr.mxu0 0.0
    %1779 = vmatpush1.msra.mxu0 0.0
    %1780 = vmatprep.subr.mxu0 0.0
    %1781 = vmatpush1.msra.mxu0 0.0
    %1782 = vmatprep.subr.mxu0 0.0
    %1783 = vmatpush1.msra.mxu0 0.0
    %1784 = vmatprep.subr.mxu0 0.0
    %1785 = vmatpush1.msra.mxu0 0.0
    %1786 = vmatprep.subr.mxu0 0.0
    %1787 = vmatpush1.msra.mxu0 0.0
    %1788 = vmatprep.subr.mxu0 0.0
    %1789 = vmatpush1.msra.mxu0 0.0
    %1790 = vmatprep.subr.mxu0 0.0
    %1791 = vmatpush1.msra.mxu0 0.0
    %1792 = vmatprep.subr.mxu0 0.0
    %1793 = vmatpush1.msra.mxu0 0.0
    %1794 = vmatprep.subr.mxu0 0.0
    %1795 = vmatpush1.msra.mxu0 0.0
    %1796 = vmatprep.subr.mxu0 0.0
    %1797 = vmatpush1.msra.mxu0 0.0
    %1798 = vmatprep.subr.mxu0 0.0
    %1799 = vmatpush1.msra.mxu0 0.0
    %1800 = vmatprep.subr.mxu0 0.0
    %1801 = vmatpush1.msra.mxu0 0.0
    %1802 = vmatprep.subr.mxu0 0.0
    %1803 = vmatpush1.msra.mxu0 0.0
    %1804 = vmatprep.subr.mxu0 0.0
    %1805 = vmatpush1.msra.mxu0 0.0
    %1806 = vmatprep.mubr.f32.mxu0 0.0
    %1807 = vmatmul.mubr.f32.gmra.mrb[0].mxu0 %v745
    %v1808 = vpop.f32.mrb[0].mxu0
    %v1809 = vadd.f32 %v727, %v1808
    %v1810 = vpop.f32.mrb[0].mxu0
    %v1811 = vadd.f32 %v727, %v1810
    %1812 = vmatprep.mubr.f32.mxu0 0.0
    %1813 = vmatmul.mubr.f32.gmra.mrb[0].mxu0 %v748
    %v1814 = vpop.f32.mrb[0].mxu0
    %v1815 = vadd.f32 %v732, %v1814
    %v1816 = vpop.f32.mrb[0].mxu0
    %v1817 = vadd.f32 %v732, %v1816
    %1818 = vmatprep.mubr.f32.mxu0 0.0
    %1819 = vmatmul.mubr.f32.gmra.mrb[0].mxu0 %v751
    %v1820 = vpop.f32.mrb[0].mxu0
    %v1821 = vadd.f32 %v737, %v1820
    %v1822 = vpop.f32.mrb[0].mxu0
    %v1823 = vadd.f32 %v737, %v1822
    %1824 = vmatprep.mubr.f32.mxu0 0.0
    %1825 = vmatmul.mubr.f32.gmra.mrb[0].mxu0 %v754
    %v1826 = vpop.f32.mrb[0].mxu0
    %v1827 = vadd.f32 %v742, %v1826
    %v1828 = vpop.f32.mrb[0].mxu0
    %v1829 = vadd.f32 %v742, %v1828
    %1830 = vdwg.mxu0
    %v1831 = vadd.f32 %v1809, %v1811
    %1832 = vadd.xlane.f32.xlu0 %v1831
    %v1833 = vpop.xlane.xlu0 %1832
    %v1834 = vadd.f32 %v1815, %v1817
    %1835 = vadd.xlane.f32.xlu0 %v1834
    %v1836 = vpop.xlane.xlu0 %1835
    %v1837 = vadd.f32 %v1821, %v1823
    %1838 = vadd.xlane.f32.xlu0 %v1837
    %v1839 = vpop.xlane.xlu0 %1838
    %v1840 = vadd.f32 %v1827, %v1829
    %1841 = vadd.xlane.f32.xlu0 %v1840
    %v1842 = vpop.xlane.xlu0 %1841
    %1843 = vmatprep.subr.mxu0 0.0
    %1844 = vmatpush1.msra.mxu0 %v1833
    %1845 = vmatprep.subr.mxu0 0.0
    %1846 = vmatpush1.msra.mxu0 %v1836
    %1847 = vmatprep.subr.mxu0 0.0
    %1848 = vmatpush1.msra.mxu0 %v1839
    %1849 = vmatprep.subr.mxu0 0.0
    %1850 = vmatpush1.msra.mxu0 %v1842
    %1851 = vmatprep.subr.mxu0 0.0
    %1852 = vmatpush1.msra.mxu0 0.0
    %1853 = vmatprep.subr.mxu0 0.0
    %1854 = vmatpush1.msra.mxu0 0.0
    %1855 = vmatprep.subr.mxu0 0.0
    %1856 = vmatpush1.msra.mxu0 0.0
    %1857 = vmatprep.subr.mxu0 0.0
    %1858 = vmatpush1.msra.mxu0 0.0
    %1859 = vmatprep.subr.mxu0 0.0
    %1860 = vmatpush1.msra.mxu0 0.0
    %1861 = vmatprep.subr.mxu0 0.0
    %1862 = vmatpush1.msra.mxu0 0.0
    %1863 = vmatprep.subr.mxu0 0.0
    %1864 = vmatpush1.msra.mxu0 0.0
    %1865 = vmatprep.subr.mxu0 0.0
    %1866 = vmatpush1.msra.mxu0 0.0
    %1867 = vmatprep.subr.mxu0 0.0
    %1868 = vmatpush1.msra.mxu0 0.0
    %1869 = vmatprep.subr.mxu0 0.0
    %1870 = vmatpush1.msra.mxu0 0.0
    %1871 = vmatprep.subr.mxu0 0.0
    %1872 = vmatpush1.msra.mxu0 0.0
    %1873 = vmatprep.subr.mxu0 0.0
    %1874 = vmatpush1.msra.mxu0 0.0
    %1875 = vmatprep.subr.mxu0 0.0
    %1876 = vmatpush1.msra.mxu0 0.0
    %1877 = vmatprep.subr.mxu0 0.0
    %1878 = vmatpush1.msra.mxu0 0.0
    %1879 = vmatprep.subr.mxu0 0.0
    %1880 = vmatpush1.msra.mxu0 0.0
    %1881 = vmatprep.subr.mxu0 0.0
    %1882 = vmatpush1.msra.mxu0 0.0
    %1883 = vmatprep.subr.mxu0 0.0
    %1884 = vmatpush1.msra.mxu0 0.0
    %1885 = vmatprep.subr.mxu0 0.0
    %1886 = vmatpush1.msra.mxu0 0.0
    %1887 = vmatprep.subr.mxu0 0.0
    %1888 = vmatpush1.msra.mxu0 0.0
    %1889 = vmatprep.subr.mxu0 0.0
    %1890 = vmatpush1.msra.mxu0 0.0
    %1891 = vmatprep.subr.mxu0 0.0
    %1892 = vmatpush1.msra.mxu0 0.0
    %1893 = vmatprep.subr.mxu0 0.0
    %1894 = vmatpush1.msra.mxu0 0.0
    %1895 = vmatprep.subr.mxu0 0.0
    %1896 = vmatpush1.msra.mxu0 0.0
    %1897 = vmatprep.subr.mxu0 0.0
    %1898 = vmatpush1.msra.mxu0 0.0
    %1899 = vmatprep.subr.mxu0 0.0
    %1900 = vmatpush1.msra.mxu0 0.0
    %1901 = vmatprep.subr.mxu0 0.0
    %1902 = vmatpush1.msra.mxu0 0.0
    %1903 = vmatprep.subr.mxu0 0.0
    %1904 = vmatpush1.msra.mxu0 0.0
    %1905 = vmatprep.subr.mxu0 0.0
    %1906 = vmatpush1.msra.mxu0 0.0
    %1907 = vmatprep.mubr.f32.mxu0 0.0
    %1908 = vmatmul.mubr.f32.gmra.mrb[0].mxu0 %v858
    %v1909 = vpop.f32.mrb[0].mxu0
    %v1910 = vadd.f32 0.0, %v1909
    %v1911 = vpop.f32.mrb[0].mxu0
    %1912 = vmatprep.mubr.f32.mxu0 0.0
    %1913 = vmatmul.mubr.f32.gmra.mrb[0].mxu0 %v861
    %v1914 = vpop.f32.mrb[0].mxu0
    %v1915 = vadd.f32 0.0, %v1914
    %v1916 = vpop.f32.mrb[0].mxu0
    %1917 = vmatprep.mubr.f32.mxu0 0.0
    %1918 = vmatmul.mubr.f32.gmra.mrb[0].mxu0 %v864
    %v1919 = vpop.f32.mrb[0].mxu0
    %v1920 = vadd.f32 0.0, %v1919
    %v1921 = vpop.f32.mrb[0].mxu0
    %1922 = vmatprep.mubr.f32.mxu0 0.0
    %1923 = vmatmul.mubr.f32.gmra.mrb[0].mxu0 %v867
    %v1924 = vpop.f32.mrb[0].mxu0
    %v1925 = vadd.f32 0.0, %v1924
    %v1926 = vpop.f32.mrb[0].mxu0
    %1927 = vdwg.mxu0
    %1929 = vset.pattern.permute.xlu0 0
    %1930 = vperm.xlu0 %1929, %v1910
    %v1931 = vpop.permute.xlu0 %1930
    %1934 = vset.pattern.permute.xlu0 0
    %1935 = vperm.xlu0 %1934, %v1915
    %v1936 = vpop.permute.xlu0 %1935
    %1939 = vset.pattern.permute.xlu0 0
    %1940 = vperm.xlu0 %1939, %v1920
    %v1941 = vpop.permute.xlu0 %1940
    %1944 = vset.pattern.permute.xlu0 0
    %1945 = vperm.xlu0 %1944, %v1925
    %v1946 = vpop.permute.xlu0 %1945
    %v1948 = vsub.f32 %v1809, %v1931
    %v1949 = vsub.f32 %v1811, %v1931
    %v1950 = vsub.f32 %v1815, %v1936
    %v1951 = vsub.f32 %v1817, %v1936
    %v1952 = vsub.f32 %v1821, %v1941
    %v1953 = vsub.f32 %v1823, %v1941
    %v1954 = vsub.f32 %v1827, %v1946
    %v1955 = vsub.f32 %v1829, %v1946
    %v1956 = vmul.f32 %v1948, %v1948
    %v1957 = vmul.f32 %v1949, %v1949
    %v1958 = vmul.f32 %v1950, %v1950
    %v1959 = vmul.f32 %v1951, %v1951
    %v1960 = vmul.f32 %v1952, %v1952
    %v1961 = vmul.f32 %v1953, %v1953
    %v1962 = vmul.f32 %v1954, %v1954
    %v1963 = vmul.f32 %v1955, %v1955
    %v1964 = vadd.f32 %v1956, %v1957
    %1965 = vadd.xlane.f32.xlu0 %v1964
    %v1966 = vpop.xlane.xlu0 %1965
    %v1967 = vadd.f32 %v1958, %v1959
    %1968 = vadd.xlane.f32.xlu0 %v1967
    %v1969 = vpop.xlane.xlu0 %1968
    %v1970 = vadd.f32 %v1960, %v1961
    %1971 = vadd.xlane.f32.xlu0 %v1970
    %v1972 = vpop.xlane.xlu0 %1971
    %v1973 = vadd.f32 %v1962, %v1963
    %1974 = vadd.xlane.f32.xlu0 %v1973
    %v1975 = vpop.xlane.xlu0 %1974
    %1976 = vmatprep.subr.mxu0 0.0
    %1977 = vmatpush1.msra.mxu0 %v1966
    %1978 = vmatprep.subr.mxu0 0.0
    %1979 = vmatpush1.msra.mxu0 %v1969
    %1980 = vmatprep.subr.mxu0 0.0
    %1981 = vmatpush1.msra.mxu0 %v1972
    %1982 = vmatprep.subr.mxu0 0.0
    %1983 = vmatpush1.msra.mxu0 %v1975
    %1984 = vmatprep.subr.mxu0 0.0
    %1985 = vmatpush1.msra.mxu0 0.0
    %1986 = vmatprep.subr.mxu0 0.0
    %1987 = vmatpush1.msra.mxu0 0.0
    %1988 = vmatprep.subr.mxu0 0.0
    %1989 = vmatpush1.msra.mxu0 0.0
    %1990 = vmatprep.subr.mxu0 0.0
    %1991 = vmatpush1.msra.mxu0 0.0
    %1992 = vmatprep.subr.mxu0 0.0
    %1993 = vmatpush1.msra.mxu0 0.0
    %1994 = vmatprep.subr.mxu0 0.0
    %1995 = vmatpush1.msra.mxu0 0.0
    %1996 = vmatprep.subr.mxu0 0.0
    %1997 = vmatpush1.msra.mxu0 0.0
    %1998 = vmatprep.subr.mxu0 0.0
    %1999 = vmatpush1.msra.mxu0 0.0
    %2000 = vmatprep.subr.mxu0 0.0
    %2001 = vmatpush1.msra.mxu0 0.0
    %2002 = vmatprep.subr.mxu0 0.0
    %2003 = vmatpush1.msra.mxu0 0.0
    %2004 = vmatprep.subr.mxu0 0.0
    %2005 = vmatpush1.msra.mxu0 0.0
    %2006 = vmatprep.subr.mxu0 0.0
    %2007 = vmatpush1.msra.mxu0 0.0
    %2008 = vmatprep.subr.mxu0 0.0
    %2009 = vmatpush1.msra.mxu0 0.0
    %2010 = vmatprep.subr.mxu0 0.0
    %2011 = vmatpush1.msra.mxu0 0.0
    %2012 = vmatprep.subr.mxu0 0.0
    %2013 = vmatpush1.msra.mxu0 0.0
    %2014 = vmatprep.subr.mxu0 0.0
    %2015 = vmatpush1.msra.mxu0 0.0
    %2016 = vmatprep.subr.mxu0 0.0
    %2017 = vmatpush1.msra.mxu0 0.0
    %2018 = vmatprep.subr.mxu0 0.0
    %2019 = vmatpush1.msra.mxu0 0.0
    %2020 = vmatprep.subr.mxu0 0.0
    %2021 = vmatpush1.msra.mxu0 0.0
    %2022 = vmatprep.subr.mxu0 0.0
    %2023 = vmatpush1.msra.mxu0 0.0
    %2024 = vmatprep.subr.mxu0 0.0
    %2025 = vmatpush1.msra.mxu0 0.0
    %2026 = vmatprep.subr.mxu0 0.0
    %2027 = vmatpush1.msra.mxu0 0.0
    %2028 = vmatprep.subr.mxu0 0.0
    %2029 = vmatpush1.msra.mxu0 0.0
    %2030 = vmatprep.subr.mxu0 0.0
    %2031 = vmatpush1.msra.mxu0 0.0
    %2032 = vmatprep.subr.mxu0 0.0
    %2033 = vmatpush1.msra.mxu0 0.0
    %2034 = vmatprep.subr.mxu0 0.0
    %2035 = vmatpush1.msra.mxu0 0.0
    %2036 = vmatprep.subr.mxu0 0.0
    %2037 = vmatpush1.msra.mxu0 0.0
    %2038 = vmatprep.subr.mxu0 0.0
    %2039 = vmatpush1.msra.mxu0 0.0
    %2040 = vmatprep.mubr.f32.mxu0 0.0
    %2041 = vmatmul.mubr.f32.gmra.mrb[0].mxu0 %v858
    %v2042 = vpop.f32.mrb[0].mxu0
    %v2043 = vadd.f32 1e-05, %v2042
    %v2044 = vpop.f32.mrb[0].mxu0
    %2045 = vmatprep.mubr.f32.mxu0 0.0
    %2046 = vmatmul.mubr.f32.gmra.mrb[0].mxu0 %v861
    %v2047 = vpop.f32.mrb[0].mxu0
    %v2048 = vadd.f32 1e-05, %v2047
    %v2049 = vpop.f32.mrb[0].mxu0
    %2050 = vmatprep.mubr.f32.mxu0 0.0
    %2051 = vmatmul.mubr.f32.gmra.mrb[0].mxu0 %v864
    %v2052 = vpop.f32.mrb[0].mxu0
    %v2053 = vadd.f32 1e-05, %v2052
    %v2054 = vpop.f32.mrb[0].mxu0
    %2055 = vmatprep.mubr.f32.mxu0 0.0
    %2056 = vmatmul.mubr.f32.gmra.mrb[0].mxu0 %v867
    %v2057 = vpop.f32.mrb[0].mxu0
    %v2058 = vadd.f32 1e-05, %v2057
    %v2059 = vpop.f32.mrb[0].mxu0
    %2060 = vdwg.mxu0
    %v2061 = vrsqrt.pop %v2043
    %v2062 = vrsqrt.pop %v2048
    %v2063 = vrsqrt.pop %v2053
    %v2064 = vrsqrt.pop %v2058
    %v2065 = vmul.f32 %v2061, %v1092
    %v2066 = vmul.f32 %v2062, %v1094
    %v2067 = vmul.f32 %v2063, %v1096
    %v2068 = vmul.f32 %v2064, %v1098
    %2070 = vset.pattern.permute.xlu0 0
    %2071 = vperm.xlu0 %2070, %v2065
    %v2072 = vpop.permute.xlu0 %2071
    %2075 = vset.pattern.permute.xlu0 0
    %2076 = vperm.xlu0 %2075, %v2066
    %v2077 = vpop.permute.xlu0 %2076
    %2080 = vset.pattern.permute.xlu0 0
    %2081 = vperm.xlu0 %2080, %v2067
    %v2082 = vpop.permute.xlu0 %2081
    %2085 = vset.pattern.permute.xlu0 0
    %2086 = vperm.xlu0 %2085, %v2068
    %v2087 = vpop.permute.xlu0 %2086
    %v2089 = vmul.f32 %v1948, %v2072
    %v2090 = vmul.f32 %v1949, %v2072
    %v2091 = vmul.f32 %v1950, %v2077
    %v2092 = vmul.f32 %v1951, %v2077
    %v2093 = vmul.f32 %v1952, %v2082
    %v2094 = vmul.f32 %v1953, %v2082
    %v2095 = vmul.f32 %v1954, %v2087
    %v2096 = vmul.f32 %v1955, %v2087
    %v2097 = vadd.f32 %v2089, %v1137
    %v2098 = vadd.f32 %v2090, %v1137
    %v2099 = vadd.f32 %v2091, %v1141
    %v2100 = vadd.f32 %v2092, %v1141
    %v2101 = vadd.f32 %v2093, %v1145
    %v2102 = vadd.f32 %v2094, %v1145
    %v2103 = vadd.f32 %v2095, %v1149
    %v2104 = vadd.f32 %v2096, %v1149
    %v2105 = vmax.f32 %v2097, 0.0
    %v2106 = vmax.f32 %v2098, 0.0
    %v2107 = vmax.f32 %v2099, 0.0
    %v2108 = vmax.f32 %v2100, 0.0
    %v2109 = vmax.f32 %v2101, 0.0
    %v2110 = vmax.f32 %v2102, 0.0
    %v2111 = vmax.f32 %v2103, 0.0
    %v2112 = vmax.f32 %v2104, 0.0
    %v2113 = vadd.f32 %v1192, %v2105
    %v2114 = vadd.f32 %v1193, %v2106
    %v2115 = vadd.f32 %v1194, %v2107
    %v2116 = vadd.f32 %v1195, %v2108
    %v2117 = vadd.f32 %v1196, %v2109
    %v2118 = vadd.f32 %v1197, %v2110
    %v2119 = vadd.f32 %v1198, %v2111
    %v2120 = vadd.f32 %v1199, %v2112
    %v2121 = vmax.f32 %v2113, 0.0
    %v2122 = vmax.f32 %v2114, 0.0
    %v2123 = vmax.f32 %v2115, 0.0
    %v2124 = vmax.f32 %v2116, 0.0
    %v2125 = vmax.f32 %v2117, 0.0
    %v2126 = vmax.f32 %v2118, 0.0
    %v2127 = vmax.f32 %v2119, 0.0
    %v2128 = vmax.f32 %v2120, 0.0
    %s2129 = scalar_lea.vmem [#allocation5], 64
    %2130 = vst [vmem:[%s2129] sm:$0xff] %v2121
    %2131 = vst [vmem:[%s2129 + $0x8] sm:$0xff] %v2122
    %2132 = vst [vmem:[%s2129 + $0x10] sm:$0xff] %v2123
    %2133 = vst [vmem:[%s2129 + $0x18] sm:$0xff] %v2124
    %2134 = vst [vmem:[%s2129 + $0x20] sm:$0xff] %v2125
    %2135 = vst [vmem:[%s2129 + $0x28] sm:$0xff] %v2126
    %2136 = vst [vmem:[%s2129 + $0x30] sm:$0xff] %v2127
    %2137 = vst [vmem:[%s2129 + $0x38] sm:$0xff] %v2128
    // Predicated region
    $region42: #{tpu_custom_call.1} parent=1 // pred_check
      _
    $region43: #{tpu_custom_call.1} parent=1 // pred_check_branch
      %2139 = sbr.rel (0) target = $region45
    $region44: #{tpu_custom_call.1} parent=1 // pred_region
      %s2141 = ssub.s32 2048, 2048
      %2142 = vsyncadd [#allocation4], %s2141
      %s2143 = sshll.u32 [#allocation5], 4
      %s2144 = int_to_ptr.vmem [resolvable:$true] %s2143
      %2149 = dma.vmem_to_hbm [thread:$0]  %s2144, 2048, %s9, [#allocation4], 256, 256, 16
    $region45: #{tpu_custom_call.1} parent=1 // pred_fallthru
      _
    // Predicated region
    $region46: #{tpu_custom_call.1} parent=1 // pred_check
      _
    $region47: #{tpu_custom_call.1} parent=1 // pred_check_branch
      %2151 = sbr.rel (0) target = $region49
    $region48: #{tpu_custom_call.1} parent=1 // pred_region
      %2152 = dma.done [#allocation4], 2048
    $region49: #{tpu_custom_call.1} parent=1 // pred_fallthru
      _
    %2153 = vsyncpa [#allocation3], 1
    %2154 = vsyncpa [#allocation4], 1

</llo_original>
